<compile_context>
chip_gen: v7x
topology: tpu7x:2x2x1
jax: 0.10.0
libtpu: 0.0.40
codegen_flags: <defaults>
</compile_context>

<pallas_src>
import functools

import jax
import jax.numpy as jnp
from jax.experimental import pallas as pl
from jax.experimental.pallas import tpu as pltpu


def _round_up(x, m):
    return (x + m - 1) // m * m


# ----------------------------------------------------------------------------
# Pallas kernels
# ----------------------------------------------------------------------------
def _matmul_bn_kernel(x_ref, w_ref, s_ref, b_ref, *rest, relu, has_res):
    # grid = (m_tiles, n_tiles, k_tiles); k is the reduction axis.
    if has_res:
        res_ref, o_ref, acc_ref = rest
    else:
        o_ref, acc_ref = rest
        res_ref = None

    k = pl.program_id(2)

    @pl.when(k == 0)
    def _():
        acc_ref[...] = jnp.zeros_like(acc_ref)

    # bf16 x bf16 -> f32 accumulate on the MXU.
    acc_ref[...] += jnp.dot(x_ref[...], w_ref[...],
                            preferred_element_type=jnp.float32)

    @pl.when(k == pl.num_programs(2) - 1)
    def _():
        r = acc_ref[...] * s_ref[...] + b_ref[...]
        if has_res:
            r = r + res_ref[...].astype(jnp.float32)
        if relu:
            r = jnp.maximum(r, 0.0)
        o_ref[...] = r.astype(o_ref.dtype)


def _maxpool_kernel(p_ref, o_ref):
    # p_ref: (9, TM, C) stacked 3x3 window taps; reduce over the tap axis.
    o_ref[...] = jnp.max(p_ref[...], axis=0)


# ----------------------------------------------------------------------------
# Memoized pallas_call builders (dedups compilation across identical shapes)
# ----------------------------------------------------------------------------
@functools.lru_cache(maxsize=None)
def _build_matmul(Mp, Kp, N, TM, TK, TN, relu, has_res):
    in_specs = [
        pl.BlockSpec((TM, TK), lambda i, j, k: (i, k)),   # patches (bf16)
        pl.BlockSpec((TK, TN), lambda i, j, k: (k, j)),   # packed weight (bf16)
        pl.BlockSpec((1, TN), lambda i, j, k: (0, j)),    # BN scale (f32)
        pl.BlockSpec((1, TN), lambda i, j, k: (0, j)),    # BN bias (f32)
    ]
    if has_res:
        in_specs.append(pl.BlockSpec((TM, TN), lambda i, j, k: (i, j)))

    call = pl.pallas_call(
        functools.partial(_matmul_bn_kernel, relu=relu, has_res=has_res),
        out_shape=jax.ShapeDtypeStruct((Mp, N), jnp.bfloat16),
        grid=(Mp // TM, N // TN, Kp // TK),
        in_specs=in_specs,
        out_specs=pl.BlockSpec((TM, TN), lambda i, j, k: (i, j)),
        scratch_shapes=[pltpu.VMEM((TM, TN), jnp.float32)],
        compiler_params=pltpu.CompilerParams(
            dimension_semantics=("parallel", "parallel", "arbitrary"),
            vmem_limit_bytes=32 * 1024 * 1024,   # tiles sized to fit v7x 64MiB
        ),
    )
    return jax.jit(call)


@functools.lru_cache(maxsize=None)
def _build_maxpool(Mp, C, TM):
    call = pl.pallas_call(
        _maxpool_kernel,
        out_shape=jax.ShapeDtypeStruct((Mp, C), jnp.bfloat16),
        grid=(Mp // TM,),
        in_specs=[pl.BlockSpec((9, TM, C), lambda i: (0, i, 0))],
        out_specs=pl.BlockSpec((TM, C), lambda i: (i, 0)),
        compiler_params=pltpu.CompilerParams(
            dimension_semantics=("parallel",),
            vmem_limit_bytes=32 * 1024 * 1024,
        ),
    )
    return jax.jit(call)


# ----------------------------------------------------------------------------
# Tiling heuristics
# ----------------------------------------------------------------------------
def _choose_tm(M, Kp):
    # Larger row tiles when K is small so per-grid-step MXU work amortizes the
    # ~0.35us pipeline overhead; smaller when K is large to bound VMEM blocks.
    if Kp <= 640:
        cap = 512
    elif Kp <= 1536:
        cap = 256
    else:
        cap = 128
    TM = min(cap, _round_up(max(M, 1), 16))
    Mp = _round_up(M, TM)
    return TM, Mp


def _choose_tk(Kp):
    # Largest multiple of 128 that divides Kp and is <= 1024 (Kp is always a
    # multiple of 128, so this terminates with at least 128).
    tk = (min(Kp, 1024) // 128) * 128
    while Kp % tk:
        tk -= 128
    return tk


# ----------------------------------------------------------------------------
# Wrappers (padding + glue)
# ----------------------------------------------------------------------------
def matmul_bn_act(x, w, scale, bias, *, relu, residual=None):
    M, K = x.shape
    Kp, N = w.shape
    TM, Mp = _choose_tm(M, Kp)
    TK = _choose_tk(Kp)
    TN = min(N, 512)

    if Kp != K:
        x = jnp.pad(x, ((0, 0), (0, Kp - K)))
    if Mp != M:
        x = jnp.pad(x, ((0, Mp - M), (0, 0)))
    x = x.astype(jnp.bfloat16)

    args = [x, w, scale, bias]
    if residual is not None:
        r = residual.astype(jnp.bfloat16)
        if Mp != M:
            r = jnp.pad(r, ((0, Mp - M), (0, 0)))
        args.append(r)

    out = _build_matmul(Mp, Kp, N, TM, TK, TN, bool(relu),
                        residual is not None)(*args)
    return out[:M]


def _im2col(x_nhwc, kh, kw, stride, pad):
    if pad > 0:
        x_nhwc = jnp.pad(x_nhwc, ((0, 0), (pad, pad), (pad, pad), (0, 0)))
    n, hp, wp, c = x_nhwc.shape
    oh = (hp - kh) // stride + 1
    ow = (wp - kw) // stride + 1
    cols = []
    for i in range(kh):
        for j in range(kw):
            cols.append(
                x_nhwc[:, i:i + stride * oh:stride, j:j + stride * ow:stride, :])
    patches = jnp.concatenate(cols, axis=-1)  # (n, oh, ow, kh*kw*c), bf16
    return patches.reshape(n * oh * ow, kh * kw * c), (n, oh, ow)


def conv_bn(x_nhwc, layer, *, stride, pad, relu, residual=None):
    kh, kw = layer["kh"], layer["kw"]
    patches, (n, oh, ow) = _im2col(x_nhwc, kh, kw, stride, pad)
    res2 = None
    if residual is not None:
        rn, rh, rw, rc = residual.shape
        res2 = residual.reshape(rn * rh * rw, rc)
    out = matmul_bn_act(patches, layer["w"], layer["scale"], layer["bias"],
                        relu=relu, residual=res2)
    cout = layer["w"].shape[1]
    return out.reshape(n, oh, ow, cout)


def maxpool_3x3_s2_p1(x_nhwc):
    n, h, w, c = x_nhwc.shape
    xp = jnp.pad(x_nhwc, ((0, 0), (1, 1), (1, 1), (0, 0)),
                 constant_values=-jnp.inf)
    oh = (h + 2 - 3) // 2 + 1
    ow = (w + 2 - 3) // 2 + 1
    cols = []
    for i in range(3):
        for j in range(3):
            cols.append(xp[:, i:i + 2 * oh:2, j:j + 2 * ow:2, :])
    patches = jnp.stack(cols, axis=0).reshape(9, n * oh * ow, c)

    M = n * oh * ow
    TM = min(512, _round_up(M, 16))
    Mp = _round_up(M, TM)
    if Mp != M:
        patches = jnp.pad(patches, ((0, 0), (0, Mp - M), (0, 0)))
    out = _build_maxpool(Mp, c, TM)(patches)[:M]
    return out.reshape(n, oh, ow, c)


# ----------------------------------------------------------------------------
# ResNet50 parameter construction (deterministic, synthetic), pre-packed:
#   w      -> (Kpad, Cout) bf16   (K = kh*kw*cin padded to a multiple of 128)
#   scale  -> (1, Cout) f32       (folded eval-mode BatchNorm)
#   bias   -> (1, Cout) f32
# ----------------------------------------------------------------------------
def _conv_bn_params(key, cin, cout, kh, kw):
    k_w, k_b = jax.random.split(key)
    fan_in = cin * kh * kw
    w = jax.random.normal(k_w, (cout, cin, kh, kw), jnp.float32) * jnp.sqrt(
        2.0 / fan_in)
    K = kh * kw * cin
    Kp = _round_up(K, 128)
    wm = jnp.transpose(w, (2, 3, 1, 0)).reshape(K, cout)
    wm = jnp.pad(wm, ((0, Kp - K), (0, 0))).astype(jnp.bfloat16)

    eps = 1e-5
    gamma = jnp.ones((cout,), jnp.float32)
    beta = 0.01 * jax.random.normal(k_b, (cout,), jnp.float32)
    mean = jnp.zeros((cout,), jnp.float32)
    var = jnp.ones((cout,), jnp.float32)
    scale = gamma / jnp.sqrt(var + eps)
    bias = beta - mean * scale
    return {
        "w": wm,
        "scale": scale.reshape(1, cout).astype(jnp.float32),
        "bias": bias.reshape(1, cout).astype(jnp.float32),
        "kh": kh, "kw": kw, "cin": cin,
    }


def init_resnet50_params(key):
    keys = iter(jax.random.split(key, 64))
    params = {"stem": _conv_bn_params(next(keys), 3, 64, 7, 7)}
    cfg = [(3, 64, 1), (4, 128, 2), (6, 256, 2), (3, 512, 2)]
    in_c = 64
    layers = []
    for n_blocks, width, first_stride in cfg:
        blocks = []
        for b in range(n_blocks):
            s = first_stride if b == 0 else 1
            blk = {
                "stride": s,
                "conv1": _conv_bn_params(next(keys), in_c, width, 1, 1),
                "conv2": _conv_bn_params(next(keys), width, width, 3, 3),
                "conv3": _conv_bn_params(next(keys), width, width * 4, 1, 1),
            }
            if s != 1 or in_c != width * 4:
                blk["downsample"] = _conv_bn_params(
                    next(keys), in_c, width * 4, 1, 1)
            blocks.append(blk)
            in_c = width * 4
        layers.append(blocks)
    params["layers"] = layers
    return params


# ----------------------------------------------------------------------------
# Forward pass (Encoder_ResNet50.forward)
# ----------------------------------------------------------------------------
def _bottleneck(x, blk):
    s = blk["stride"]
    out = conv_bn(x, blk["conv1"], stride=1, pad=0, relu=True)
    out = conv_bn(out, blk["conv2"], stride=s, pad=1, relu=True)
    if "downsample" in blk:
        identity = conv_bn(x, blk["downsample"], stride=s, pad=0, relu=False)
    else:
        identity = x
    # Residual add + ReLU fused into the conv3 matmul epilogue.
    out = conv_bn(out, blk["conv3"], stride=1, pad=0, relu=True,
                  residual=identity)
    return out


def encoder_resnet50(x_nchw, params):
    # NCHW (PyTorch) -> NHWC (internal, bf16). Matmuls run bf16 on the MXU with
    # f32 accumulation/epilogue; accepted precision delta vs. PyTorch f32 conv.
    x = jnp.transpose(x_nchw, (0, 2, 3, 1)).astype(jnp.bfloat16)
    x = conv_bn(x, params["stem"], stride=2, pad=3, relu=True)
    x = maxpool_3x3_s2_p1(x)
    for blocks in params["layers"]:
        for blk in blocks:
            x = _bottleneck(x, blk)
    # conv_base output is (N, 2048, H/32, W/32); Flatten(2,3) -> (N, 2048, H*W/1024)
    n, h, w, c = x.shape
    feats = jnp.transpose(x, (0, 3, 1, 2)).reshape(n, c, h * w)
    return feats.astype(jnp.float32)


if __name__ == "__main__":
    key = jax.random.PRNGKey(0)
    k_params, k_x = jax.random.split(key)
    params = init_resnet50_params(k_params)

    # Small input consistent with the module: NCHW, 3 channels (resnet50 stem).
    x = jax.random.normal(k_x, (2, 3, 32, 32), jnp.float32)

    feats = encoder_resnet50(x, params)
    feats = jax.block_until_ready(feats)

    assert feats.shape == (2, 2048, 1), feats.shape
    assert feats.dtype == jnp.float32
    assert bool(jnp.all(jnp.isfinite(feats)))
    print("KERNEL_OK")
</pallas_src>

<mosaic_0001>
module attributes {stable_mosaic.version = 11 : i64} {
  func.func @_matmul_bn_kernel(%arg0: i32, %arg1: i32, %arg2: i32, %arg3: memref<512x256xbf16, #tpu.memory_space<vmem>>, %arg4: memref<256x64xbf16, #tpu.memory_space<vmem>>, %arg5: memref<1x64xf32, #tpu.memory_space<vmem>>, %arg6: memref<1x64xf32, #tpu.memory_space<vmem>>, %arg7: memref<512x64xbf16, #tpu.memory_space<vmem>>, %arg8: memref<512x64xf32, #tpu.memory_space<vmem>>) attributes {dimension_semantics = [#tpu.dimension_semantics<parallel>, #tpu.dimension_semantics<parallel>, #tpu.dimension_semantics<arbitrary>], iteration_bounds = array<i64: 1, 1, 1>, scalar_prefetch = 0 : i64, scratch_operands = 1 : i64, tpu.core_type = #tpu.core_type<tc>, window_params = [{transform_indices = @transform_0, window_bounds = array<i64: 512, 256>}, {transform_indices = @transform_1, window_bounds = array<i64: 256, 64>}, {transform_indices = @transform_2, window_bounds = array<i64: 1, 64>}, {transform_indices = @transform_3, window_bounds = array<i64: 1, 64>}, {transform_indices = @transform_4, window_bounds = array<i64: 512, 64>}]} {
    %c0_i32 = arith.constant 0 : i32
    %0 = arith.cmpi eq, %arg2, %c0_i32 : i32
    %1 = arith.extui %0 : i1 to i32
    %c0_i32_0 = arith.constant 0 : i32
    %2 = arith.cmpi ne, %1, %c0_i32_0 : i32
    scf.if %2 {
      %cst_10 = arith.constant 0.000000e+00 : f32
      %12 = vector.broadcast %cst_10 : f32 to vector<512x64xf32>
      %c0_11 = arith.constant 0 : index
      %c0_12 = arith.constant 0 : index
      %13 = vector.load %arg8[%c0_11, %c0_12] : memref<512x64xf32, #tpu.memory_space<vmem>>, vector<512x64xf32>
      tpu.vector_store %arg8[%c0_11, %c0_12], %12 {strides = array<i32>} : memref<512x64xf32, #tpu.memory_space<vmem>>, vector<512x64xf32>,
    } else {
    }
    %c0 = arith.constant 0 : index
    %c0_1 = arith.constant 0 : index
    %3 = vector.load %arg8[%c0, %c0_1] : memref<512x64xf32, #tpu.memory_space<vmem>>, vector<512x64xf32>
    %c0_2 = arith.constant 0 : index
    %c0_3 = arith.constant 0 : index
    %4 = vector.load %arg3[%c0_2, %c0_3] : memref<512x256xbf16, #tpu.memory_space<vmem>>, vector<512x256xbf16>
    %c0_4 = arith.constant 0 : index
    %c0_5 = arith.constant 0 : index
    %5 = vector.load %arg4[%c0_4, %c0_5] : memref<256x64xbf16, #tpu.memory_space<vmem>>, vector<256x64xbf16>
    %cst = arith.constant dense<0.000000e+00> : vector<512x64xf32>
    %6 = tpu.matmul %4, %5, %cst {dimension_numbers = #tpu.dot_dimension_numbers<[1], [0], [0], [1], [0, 0, 1, 1], [], []>} : vector<512x256xbf16>, vector<256x64xbf16>, vector<512x64xf32> -> vector<512x64xf32>
    %7 = arith.addf %3, %6 : vector<512x64xf32>
    %c0_6 = arith.constant 0 : index
    %c0_7 = arith.constant 0 : index
    %8 = vector.load %arg8[%c0_6, %c0_7] : memref<512x64xf32, #tpu.memory_space<vmem>>, vector<512x64xf32>
    tpu.vector_store %arg8[%c0_6, %c0_7], %7 {strides = array<i32>} : memref<512x64xf32, #tpu.memory_space<vmem>>, vector<512x64xf32>,
    %c0_i32_8 = arith.constant 0 : i32
    %9 = arith.cmpi eq, %arg2, %c0_i32_8 : i32
    %10 = arith.extui %9 : i1 to i32
    %c0_i32_9 = arith.constant 0 : i32
    %11 = arith.cmpi ne, %10, %c0_i32_9 : i32
    scf.if %11 {
      %c0_10 = arith.constant 0 : index
      %c0_11 = arith.constant 0 : index
      %12 = vector.load %arg8[%c0_10, %c0_11] : memref<512x64xf32, #tpu.memory_space<vmem>>, vector<512x64xf32>
      %c0_12 = arith.constant 0 : index
      %c0_13 = arith.constant 0 : index
      %13 = vector.load %arg5[%c0_12, %c0_13] : memref<1x64xf32, #tpu.memory_space<vmem>>, vector<1x64xf32>
      %14 = vector.broadcast %13 : vector<1x64xf32> to vector<512x64xf32>
      %15 = arith.mulf %12, %14 : vector<512x64xf32>
      %c0_14 = arith.constant 0 : index
      %c0_15 = arith.constant 0 : index
      %16 = vector.load %arg6[%c0_14, %c0_15] : memref<1x64xf32, #tpu.memory_space<vmem>>, vector<1x64xf32>
      %17 = vector.broadcast %16 : vector<1x64xf32> to vector<512x64xf32>
      %18 = arith.addf %15, %17 : vector<512x64xf32>
      %cst_16 = arith.constant 0.000000e+00 : f32
      %19 = vector.broadcast %cst_16 : f32 to vector<512x64xf32>
      %20 = arith.maximumf %18, %19 : vector<512x64xf32>
      %21 = arith.truncf %20 : vector<512x64xf32> to vector<512x64xbf16>
      %c0_17 = arith.constant 0 : index
      %c0_18 = arith.constant 0 : index
      %22 = vector.load %arg7[%c0_17, %c0_18] : memref<512x64xbf16, #tpu.memory_space<vmem>>, vector<512x64xbf16>
      tpu.vector_store %arg7[%c0_17, %c0_18], %21 {strides = array<i32>} : memref<512x64xbf16, #tpu.memory_space<vmem>>, vector<512x64xbf16>,
    } else {
    }
    return
  }
  func.func @transform_0(%arg0: i32, %arg1: i32, %arg2: i32) -> (i32, i32) {
    %c0_i32 = arith.constant 0 : i32
    return %arg0, %arg2 : i32, i32
  }
  func.func @transform_1(%arg0: i32, %arg1: i32, %arg2: i32) -> (i32, i32) {
    %c0_i32 = arith.constant 0 : i32
    return %arg2, %arg1 : i32, i32
  }
  func.func @transform_2(%arg0: i32, %arg1: i32, %arg2: i32) -> (i32, i32) {
    %c0_i32 = arith.constant 0 : i32
    %c0_i32_0 = arith.constant 0 : i32
    return %c0_i32, %arg1 : i32, i32
  }
  func.func @transform_3(%arg0: i32, %arg1: i32, %arg2: i32) -> (i32, i32) {
    %c0_i32 = arith.constant 0 : i32
    %c0_i32_0 = arith.constant 0 : i32
    return %c0_i32, %arg1 : i32, i32
  }
  func.func @transform_4(%arg0: i32, %arg1: i32, %arg2: i32) -> (i32, i32) {
    %c0_i32 = arith.constant 0 : i32
    return %arg0, %arg1 : i32, i32
  }
}

</mosaic_0001>

<llo_original>
// kernel: tpu_custom_call.1
$region0: #{tpu_custom_call.1}
  #allocation0 [shape = 'u32[]', space=smem, size = 0x4, offset = 0x4, fixed_abs, tag = 'smem constant byte address 0x4 - core index']
  #allocation1 [shape = 'u32[144,128]{1,0:T(1,128)}', space=vmem, size = 0x12000, scoped, tag = 'internal scratch']
  #allocation2 [shape = 'f32[512,64]{1,0:T(8,128)}', space=vmem, size = 0x40000, scoped, tag = 'scratch operand']
  %s0 = inlined_call_operand.hbm [shape: bf16[512,256], index: 0, kind: input, shape index: {}]
  %s1 = inlined_call_operand.vmem [shape: bf16[256,64], index: 1, kind: input, shape index: {}]
  %s2 = inlined_call_operand.vmem [shape: f32[1,64], index: 2, kind: input, shape index: {}]
  %s3 = inlined_call_operand.vmem [shape: f32[1,64], index: 3, kind: input, shape index: {}]
  %s4 = inlined_call_operand.vmem [shape: bf16[512,64], index: 4, kind: output, shape index: {}]
  %s5 = sld [smem:[#allocation0]]
  $region38: #{tpu_custom_call.1} parent=0
    _
  %s7 = ssub.s32 1, %s5
  %s8 = scalar_select 0, %s7, %s5
  $region1: #{tpu_custom_call.1} parent=0
    #allocation3 [shape = 'u8[262144]{0}', space=vmem, size = 0x40000, scoped, tag = 'input window, operand 0, single buffered']
    #allocation4 [shape = 's32[1]{0}', space=sflag, size = 0x4, scoped, tag = 'scoped memory for tpu_custom_call.1']
    %9 = vsyncpa [#allocation4], 0
    // Predicated region
    $region2: #{tpu_custom_call.1} parent=1 // pred_check
      _
    $region3: #{tpu_custom_call.1} parent=1 // pred_check_branch
      %11 = sbr.rel (0) target = $region5
    $region4: #{tpu_custom_call.1} parent=1 // pred_region
      %s13 = ssub.s32 8192, 8192
      %14 = vsyncadd [#allocation4], %s13
      %s15 = sshll.u32 [#allocation3], 4
      %s16 = int_to_ptr.vmem [resolvable:$true] %s15
      %21 = dma.hbm_to_vmem [thread:$0]  %s0, 8192, %s16, [#allocation4], 128, 128, 8
    $region5: #{tpu_custom_call.1} parent=1 // pred_fallthru
      _
    // Predicated region
    $region6: #{tpu_custom_call.1} parent=1 // pred_check
      _
    $region7: #{tpu_custom_call.1} parent=1 // pred_check_branch
      %23 = sbr.rel (0) target = $region9
    $region8: #{tpu_custom_call.1} parent=1 // pred_region
      _
    $region9: #{tpu_custom_call.1} parent=1 // pred_fallthru
      _
    // Predicated region
    $region10: #{tpu_custom_call.1} parent=1 // pred_check
      _
    $region11: #{tpu_custom_call.1} parent=1 // pred_check_branch
      %25 = sbr.rel (0) target = $region13
    $region12: #{tpu_custom_call.1} parent=1 // pred_region
      _
    $region13: #{tpu_custom_call.1} parent=1 // pred_fallthru
      _
    // Predicated region
    $region14: #{tpu_custom_call.1} parent=1 // pred_check
      _
    $region15: #{tpu_custom_call.1} parent=1 // pred_check_branch
      %27 = sbr.rel (0) target = $region17
    $region16: #{tpu_custom_call.1} parent=1 // pred_region
      _
    $region17: #{tpu_custom_call.1} parent=1 // pred_fallthru
      _
    // Predicated region
    $region18: #{tpu_custom_call.1} parent=1 // pred_check
      _
    $region19: #{tpu_custom_call.1} parent=1 // pred_check_branch
      %29 = sbr.rel (0) target = $region21
    $region20: #{tpu_custom_call.1} parent=1 // pred_region
      %30 = dma.done [#allocation4], 8192
    $region21: #{tpu_custom_call.1} parent=1 // pred_fallthru
      _
    %p32 = scmp.eq.s32.totalorder 0, 0
    // Predicated region
    $region22: #{tpu_custom_call.1} parent=1 // pred_check
      %p33 = pneg %p32
    $region23: #{tpu_custom_call.1} parent=1 // pred_check_branch
      %35 = sbr.rel (%p33) target = $region25
    $region24: #{tpu_custom_call.1} parent=1 // pred_region
      %vm36 = vcmask 523264
      %37 = vst.msk [vmem:[#allocation2] sm:$0xff] %vm36, 0.0
      %38 = vst.msk [vmem:[#allocation2 + $0x8] sm:$0xff] %vm36, 0.0
      %39 = vst.msk [vmem:[#allocation2 + $0x10] sm:$0xff] %vm36, 0.0
      %40 = vst.msk [vmem:[#allocation2 + $0x18] sm:$0xff] %vm36, 0.0
      %41 = vst.msk [vmem:[#allocation2 + $0x20] sm:$0xff] %vm36, 0.0
      %42 = vst.msk [vmem:[#allocation2 + $0x28] sm:$0xff] %vm36, 0.0
      %43 = vst.msk [vmem:[#allocation2 + $0x30] sm:$0xff] %vm36, 0.0
      %44 = vst.msk [vmem:[#allocation2 + $0x38] sm:$0xff] %vm36, 0.0
      %45 = vst.msk [vmem:[#allocation2 + $0x40] sm:$0xff] %vm36, 0.0
      %46 = vst.msk [vmem:[#allocation2 + $0x48] sm:$0xff] %vm36, 0.0
      %47 = vst.msk [vmem:[#allocation2 + $0x50] sm:$0xff] %vm36, 0.0
      %48 = vst.msk [vmem:[#allocation2 + $0x58] sm:$0xff] %vm36, 0.0
      %49 = vst.msk [vmem:[#allocation2 + $0x60] sm:$0xff] %vm36, 0.0
      %50 = vst.msk [vmem:[#allocation2 + $0x68] sm:$0xff] %vm36, 0.0
      %51 = vst.msk [vmem:[#allocation2 + $0x70] sm:$0xff] %vm36, 0.0
      %52 = vst.msk [vmem:[#allocation2 + $0x78] sm:$0xff] %vm36, 0.0
      %53 = vst.msk [vmem:[#allocation2 + $0x80] sm:$0xff] %vm36, 0.0
      %54 = vst.msk [vmem:[#allocation2 + $0x88] sm:$0xff] %vm36, 0.0
      %55 = vst.msk [vmem:[#allocation2 + $0x90] sm:$0xff] %vm36, 0.0
      %56 = vst.msk [vmem:[#allocation2 + $0x98] sm:$0xff] %vm36, 0.0
      %57 = vst.msk [vmem:[#allocation2 + $0xa0] sm:$0xff] %vm36, 0.0
      %58 = vst.msk [vmem:[#allocation2 + $0xa8] sm:$0xff] %vm36, 0.0
      %59 = vst.msk [vmem:[#allocation2 + $0xb0] sm:$0xff] %vm36, 0.0
      %60 = vst.msk [vmem:[#allocation2 + $0xb8] sm:$0xff] %vm36, 0.0
      %61 = vst.msk [vmem:[#allocation2 + $0xc0] sm:$0xff] %vm36, 0.0
      %62 = vst.msk [vmem:[#allocation2 + $0xc8] sm:$0xff] %vm36, 0.0
      %63 = vst.msk [vmem:[#allocation2 + $0xd0] sm:$0xff] %vm36, 0.0
      %64 = vst.msk [vmem:[#allocation2 + $0xd8] sm:$0xff] %vm36, 0.0
      %65 = vst.msk [vmem:[#allocation2 + $0xe0] sm:$0xff] %vm36, 0.0
      %66 = vst.msk [vmem:[#allocation2 + $0xe8] sm:$0xff] %vm36, 0.0
      %67 = vst.msk [vmem:[#allocation2 + $0xf0] sm:$0xff] %vm36, 0.0
      %68 = vst.msk [vmem:[#allocation2 + $0xf8] sm:$0xff] %vm36, 0.0
      %69 = vst.msk [vmem:[#allocation2 + $0x100] sm:$0xff] %vm36, 0.0
      %70 = vst.msk [vmem:[#allocation2 + $0x108] sm:$0xff] %vm36, 0.0
      %71 = vst.msk [vmem:[#allocation2 + $0x110] sm:$0xff] %vm36, 0.0
      %72 = vst.msk [vmem:[#allocation2 + $0x118] sm:$0xff] %vm36, 0.0
      %73 = vst.msk [vmem:[#allocation2 + $0x120] sm:$0xff] %vm36, 0.0
      %74 = vst.msk [vmem:[#allocation2 + $0x128] sm:$0xff] %vm36, 0.0
      %75 = vst.msk [vmem:[#allocation2 + $0x130] sm:$0xff] %vm36, 0.0
      %76 = vst.msk [vmem:[#allocation2 + $0x138] sm:$0xff] %vm36, 0.0
      %77 = vst.msk [vmem:[#allocation2 + $0x140] sm:$0xff] %vm36, 0.0
      %78 = vst.msk [vmem:[#allocation2 + $0x148] sm:$0xff] %vm36, 0.0
      %79 = vst.msk [vmem:[#allocation2 + $0x150] sm:$0xff] %vm36, 0.0
      %80 = vst.msk [vmem:[#allocation2 + $0x158] sm:$0xff] %vm36, 0.0
      %81 = vst.msk [vmem:[#allocation2 + $0x160] sm:$0xff] %vm36, 0.0
      %82 = vst.msk [vmem:[#allocation2 + $0x168] sm:$0xff] %vm36, 0.0
      %83 = vst.msk [vmem:[#allocation2 + $0x170] sm:$0xff] %vm36, 0.0
      %84 = vst.msk [vmem:[#allocation2 + $0x178] sm:$0xff] %vm36, 0.0
      %85 = vst.msk [vmem:[#allocation2 + $0x180] sm:$0xff] %vm36, 0.0
      %86 = vst.msk [vmem:[#allocation2 + $0x188] sm:$0xff] %vm36, 0.0
      %87 = vst.msk [vmem:[#allocation2 + $0x190] sm:$0xff] %vm36, 0.0
      %88 = vst.msk [vmem:[#allocation2 + $0x198] sm:$0xff] %vm36, 0.0
      %89 = vst.msk [vmem:[#allocation2 + $0x1a0] sm:$0xff] %vm36, 0.0
      %90 = vst.msk [vmem:[#allocation2 + $0x1a8] sm:$0xff] %vm36, 0.0
      %91 = vst.msk [vmem:[#allocation2 + $0x1b0] sm:$0xff] %vm36, 0.0
      %92 = vst.msk [vmem:[#allocation2 + $0x1b8] sm:$0xff] %vm36, 0.0
      %93 = vst.msk [vmem:[#allocation2 + $0x1c0] sm:$0xff] %vm36, 0.0
      %94 = vst.msk [vmem:[#allocation2 + $0x1c8] sm:$0xff] %vm36, 0.0
      %95 = vst.msk [vmem:[#allocation2 + $0x1d0] sm:$0xff] %vm36, 0.0
      %96 = vst.msk [vmem:[#allocation2 + $0x1d8] sm:$0xff] %vm36, 0.0
      %97 = vst.msk [vmem:[#allocation2 + $0x1e0] sm:$0xff] %vm36, 0.0
      %98 = vst.msk [vmem:[#allocation2 + $0x1e8] sm:$0xff] %vm36, 0.0
      %99 = vst.msk [vmem:[#allocation2 + $0x1f0] sm:$0xff] %vm36, 0.0
      %100 = vst.msk [vmem:[#allocation2 + $0x1f8] sm:$0xff] %vm36, 0.0
    $region25: #{tpu_custom_call.1} parent=1 // pred_fallthru
      _
    %v101 = vld [vmem:[#allocation2] sm:$0xff]
    %v102 = vld [vmem:[#allocation2 + $0x8] sm:$0xff]
    %v103 = vld [vmem:[#allocation2 + $0x10] sm:$0xff]
    %v104 = vld [vmem:[#allocation2 + $0x18] sm:$0xff]
    %v105 = vld [vmem:[#allocation2 + $0x20] sm:$0xff]
    %v106 = vld [vmem:[#allocation2 + $0x28] sm:$0xff]
    %v107 = vld [vmem:[#allocation2 + $0x30] sm:$0xff]
    %v108 = vld [vmem:[#allocation2 + $0x38] sm:$0xff]
    %v109 = vld [vmem:[#allocation2 + $0x40] sm:$0xff]
    %v110 = vld [vmem:[#allocation2 + $0x48] sm:$0xff]
    %v111 = vld [vmem:[#allocation2 + $0x50] sm:$0xff]
    %v112 = vld [vmem:[#allocation2 + $0x58] sm:$0xff]
    %v113 = vld [vmem:[#allocation2 + $0x60] sm:$0xff]
    %v114 = vld [vmem:[#allocation2 + $0x68] sm:$0xff]
    %v115 = vld [vmem:[#allocation2 + $0x70] sm:$0xff]
    %v116 = vld [vmem:[#allocation2 + $0x78] sm:$0xff]
    %v117 = vld [vmem:[#allocation2 + $0x80] sm:$0xff]
    %v118 = vld [vmem:[#allocation2 + $0x88] sm:$0xff]
    %v119 = vld [vmem:[#allocation2 + $0x90] sm:$0xff]
    %v120 = vld [vmem:[#allocation2 + $0x98] sm:$0xff]
    %v121 = vld [vmem:[#allocation2 + $0xa0] sm:$0xff]
    %v122 = vld [vmem:[#allocation2 + $0xa8] sm:$0xff]
    %v123 = vld [vmem:[#allocation2 + $0xb0] sm:$0xff]
    %v124 = vld [vmem:[#allocation2 + $0xb8] sm:$0xff]
    %v125 = vld [vmem:[#allocation2 + $0xc0] sm:$0xff]
    %v126 = vld [vmem:[#allocation2 + $0xc8] sm:$0xff]
    %v127 = vld [vmem:[#allocation2 + $0xd0] sm:$0xff]
    %v128 = vld [vmem:[#allocation2 + $0xd8] sm:$0xff]
    %v129 = vld [vmem:[#allocation2 + $0xe0] sm:$0xff]
    %v130 = vld [vmem:[#allocation2 + $0xe8] sm:$0xff]
    %v131 = vld [vmem:[#allocation2 + $0xf0] sm:$0xff]
    %v132 = vld [vmem:[#allocation2 + $0xf8] sm:$0xff]
    %v133 = vld [vmem:[#allocation2 + $0x100] sm:$0xff]
    %v134 = vld [vmem:[#allocation2 + $0x108] sm:$0xff]
    %v135 = vld [vmem:[#allocation2 + $0x110] sm:$0xff]
    %v136 = vld [vmem:[#allocation2 + $0x118] sm:$0xff]
    %v137 = vld [vmem:[#allocation2 + $0x120] sm:$0xff]
    %v138 = vld [vmem:[#allocation2 + $0x128] sm:$0xff]
    %v139 = vld [vmem:[#allocation2 + $0x130] sm:$0xff]
    %v140 = vld [vmem:[#allocation2 + $0x138] sm:$0xff]
    %v141 = vld [vmem:[#allocation2 + $0x140] sm:$0xff]
    %v142 = vld [vmem:[#allocation2 + $0x148] sm:$0xff]
    %v143 = vld [vmem:[#allocation2 + $0x150] sm:$0xff]
    %v144 = vld [vmem:[#allocation2 + $0x158] sm:$0xff]
    %v145 = vld [vmem:[#allocation2 + $0x160] sm:$0xff]
    %v146 = vld [vmem:[#allocation2 + $0x168] sm:$0xff]
    %v147 = vld [vmem:[#allocation2 + $0x170] sm:$0xff]
    %v148 = vld [vmem:[#allocation2 + $0x178] sm:$0xff]
    %v149 = vld [vmem:[#allocation2 + $0x180] sm:$0xff]
    %v150 = vld [vmem:[#allocation2 + $0x188] sm:$0xff]
    %v151 = vld [vmem:[#allocation2 + $0x190] sm:$0xff]
    %v152 = vld [vmem:[#allocation2 + $0x198] sm:$0xff]
    %v153 = vld [vmem:[#allocation2 + $0x1a0] sm:$0xff]
    %v154 = vld [vmem:[#allocation2 + $0x1a8] sm:$0xff]
    %v155 = vld [vmem:[#allocation2 + $0x1b0] sm:$0xff]
    %v156 = vld [vmem:[#allocation2 + $0x1b8] sm:$0xff]
    %v157 = vld [vmem:[#allocation2 + $0x1c0] sm:$0xff]
    %v158 = vld [vmem:[#allocation2 + $0x1c8] sm:$0xff]
    %v159 = vld [vmem:[#allocation2 + $0x1d0] sm:$0xff]
    %v160 = vld [vmem:[#allocation2 + $0x1d8] sm:$0xff]
    %v161 = vld [vmem:[#allocation2 + $0x1e0] sm:$0xff]
    %v162 = vld [vmem:[#allocation2 + $0x1e8] sm:$0xff]
    %v163 = vld [vmem:[#allocation2 + $0x1f0] sm:$0xff]
    %v164 = vld [vmem:[#allocation2 + $0x1f8] sm:$0xff]
    %v165 = vld [vmem:[#allocation3] sm:$0xff]
    %v166 = vld [vmem:[#allocation3 + $0x8] sm:$0xff]
    %v167 = vld [vmem:[#allocation3 + $0x10] sm:$0xff]
    %v168 = vld [vmem:[#allocation3 + $0x18] sm:$0xff]
    %v169 = vld [vmem:[#allocation3 + $0x20] sm:$0xff]
    %v170 = vld [vmem:[#allocation3 + $0x28] sm:$0xff]
    %v171 = vld [vmem:[#allocation3 + $0x30] sm:$0xff]
    %v172 = vld [vmem:[#allocation3 + $0x38] sm:$0xff]
    %v173 = vld [vmem:[#allocation3 + $0x40] sm:$0xff]
    %v174 = vld [vmem:[#allocation3 + $0x48] sm:$0xff]
    %v175 = vld [vmem:[#allocation3 + $0x50] sm:$0xff]
    %v176 = vld [vmem:[#allocation3 + $0x58] sm:$0xff]
    %v177 = vld [vmem:[#allocation3 + $0x60] sm:$0xff]
    %v178 = vld [vmem:[#allocation3 + $0x68] sm:$0xff]
    %v179 = vld [vmem:[#allocation3 + $0x70] sm:$0xff]
    %v180 = vld [vmem:[#allocation3 + $0x78] sm:$0xff]
    %v181 = vld [vmem:[#allocation3 + $0x80] sm:$0xff]
    %v182 = vld [vmem:[#allocation3 + $0x88] sm:$0xff]
    %v183 = vld [vmem:[#allocation3 + $0x90] sm:$0xff]
    %v184 = vld [vmem:[#allocation3 + $0x98] sm:$0xff]
    %v185 = vld [vmem:[#allocation3 + $0xa0] sm:$0xff]
    %v186 = vld [vmem:[#allocation3 + $0xa8] sm:$0xff]
    %v187 = vld [vmem:[#allocation3 + $0xb0] sm:$0xff]
    %v188 = vld [vmem:[#allocation3 + $0xb8] sm:$0xff]
    %v189 = vld [vmem:[#allocation3 + $0xc0] sm:$0xff]
    %v190 = vld [vmem:[#allocation3 + $0xc8] sm:$0xff]
    %v191 = vld [vmem:[#allocation3 + $0xd0] sm:$0xff]
    %v192 = vld [vmem:[#allocation3 + $0xd8] sm:$0xff]
    %v193 = vld [vmem:[#allocation3 + $0xe0] sm:$0xff]
    %v194 = vld [vmem:[#allocation3 + $0xe8] sm:$0xff]
    %v195 = vld [vmem:[#allocation3 + $0xf0] sm:$0xff]
    %v196 = vld [vmem:[#allocation3 + $0xf8] sm:$0xff]
    %v197 = vld [vmem:[#allocation3 + $0x100] sm:$0xff]
    %v198 = vld [vmem:[#allocation3 + $0x108] sm:$0xff]
    %v199 = vld [vmem:[#allocation3 + $0x110] sm:$0xff]
    %v200 = vld [vmem:[#allocation3 + $0x118] sm:$0xff]
    %v201 = vld [vmem:[#allocation3 + $0x120] sm:$0xff]
    %v202 = vld [vmem:[#allocation3 + $0x128] sm:$0xff]
    %v203 = vld [vmem:[#allocation3 + $0x130] sm:$0xff]
    %v204 = vld [vmem:[#allocation3 + $0x138] sm:$0xff]
    %v205 = vld [vmem:[#allocation3 + $0x140] sm:$0xff]
    %v206 = vld [vmem:[#allocation3 + $0x148] sm:$0xff]
    %v207 = vld [vmem:[#allocation3 + $0x150] sm:$0xff]
    %v208 = vld [vmem:[#allocation3 + $0x158] sm:$0xff]
    %v209 = vld [vmem:[#allocation3 + $0x160] sm:$0xff]
    %v210 = vld [vmem:[#allocation3 + $0x168] sm:$0xff]
    %v211 = vld [vmem:[#allocation3 + $0x170] sm:$0xff]
    %v212 = vld [vmem:[#allocation3 + $0x178] sm:$0xff]
    %v213 = vld [vmem:[#allocation3 + $0x180] sm:$0xff]
    %v214 = vld [vmem:[#allocation3 + $0x188] sm:$0xff]
    %v215 = vld [vmem:[#allocation3 + $0x190] sm:$0xff]
    %v216 = vld [vmem:[#allocation3 + $0x198] sm:$0xff]
    %v217 = vld [vmem:[#allocation3 + $0x1a0] sm:$0xff]
    %v218 = vld [vmem:[#allocation3 + $0x1a8] sm:$0xff]
    %v219 = vld [vmem:[#allocation3 + $0x1b0] sm:$0xff]
    %v220 = vld [vmem:[#allocation3 + $0x1b8] sm:$0xff]
    %v221 = vld [vmem:[#allocation3 + $0x1c0] sm:$0xff]
    %v222 = vld [vmem:[#allocation3 + $0x1c8] sm:$0xff]
    %v223 = vld [vmem:[#allocation3 + $0x1d0] sm:$0xff]
    %v224 = vld [vmem:[#allocation3 + $0x1d8] sm:$0xff]
    %v225 = vld [vmem:[#allocation3 + $0x1e0] sm:$0xff]
    %v226 = vld [vmem:[#allocation3 + $0x1e8] sm:$0xff]
    %v227 = vld [vmem:[#allocation3 + $0x1f0] sm:$0xff]
    %v228 = vld [vmem:[#allocation3 + $0x1f8] sm:$0xff]
    %v229 = vld [vmem:[%s1] sm:$0xf]
    %v230 = vld [vmem:[%s1 + $0x4] sm:$0xf]
    %v231 = vld [vmem:[%s1 + $0x8] sm:$0xf]
    %v232 = vld [vmem:[%s1 + $0xc] sm:$0xf]
    %v233 = vld [vmem:[%s1 + $0x10] sm:$0xf]
    %v234 = vld [vmem:[%s1 + $0x14] sm:$0xf]
    %v235 = vld [vmem:[%s1 + $0x18] sm:$0xf]
    %v236 = vld [vmem:[%s1 + $0x1c] sm:$0xf]
    %v237 = vld [vmem:[%s1 + $0x20] sm:$0xf]
    %v238 = vld [vmem:[%s1 + $0x24] sm:$0xf]
    %v239 = vld [vmem:[%s1 + $0x28] sm:$0xf]
    %v240 = vld [vmem:[%s1 + $0x2c] sm:$0xf]
    %v241 = vld [vmem:[%s1 + $0x30] sm:$0xf]
    %v242 = vld [vmem:[%s1 + $0x34] sm:$0xf]
    %v243 = vld [vmem:[%s1 + $0x38] sm:$0xf]
    %v244 = vld [vmem:[%s1 + $0x3c] sm:$0xf]
    %v245 = vld [vmem:[%s1 + $0x40] sm:$0xf]
    %v246 = vld [vmem:[%s1 + $0x44] sm:$0xf]
    %v247 = vld [vmem:[%s1 + $0x48] sm:$0xf]
    %v248 = vld [vmem:[%s1 + $0x4c] sm:$0xf]
    %v249 = vld [vmem:[%s1 + $0x50] sm:$0xf]
    %v250 = vld [vmem:[%s1 + $0x54] sm:$0xf]
    %v251 = vld [vmem:[%s1 + $0x58] sm:$0xf]
    %v252 = vld [vmem:[%s1 + $0x5c] sm:$0xf]
    %v253 = vld [vmem:[%s1 + $0x60] sm:$0xf]
    %v254 = vld [vmem:[%s1 + $0x64] sm:$0xf]
    %v255 = vld [vmem:[%s1 + $0x68] sm:$0xf]
    %v256 = vld [vmem:[%s1 + $0x6c] sm:$0xf]
    %v257 = vld [vmem:[%s1 + $0x70] sm:$0xf]
    %v258 = vld [vmem:[%s1 + $0x74] sm:$0xf]
    %v259 = vld [vmem:[%s1 + $0x78] sm:$0xf]
    %v260 = vld [vmem:[%s1 + $0x7c] sm:$0xf]
    %v325 = vunpack.c.l.b16 %v165
    %v326 = vunpack.c.h.b16 %v165
    %v327 = vunpack.c.l.b16 %v166
    %v328 = vunpack.c.h.b16 %v166
    %v329 = vunpack.c.l.b16 %v167
    %v330 = vunpack.c.h.b16 %v167
    %v331 = vunpack.c.l.b16 %v168
    %v332 = vunpack.c.h.b16 %v168
    %v333 = vunpack.c.l.b16 %v169
    %v334 = vunpack.c.h.b16 %v169
    %v335 = vunpack.c.l.b16 %v170
    %v336 = vunpack.c.h.b16 %v170
    %v337 = vunpack.c.l.b16 %v171
    %v338 = vunpack.c.h.b16 %v171
    %v339 = vunpack.c.l.b16 %v172
    %v340 = vunpack.c.h.b16 %v172
    %v341 = vunpack.c.l.b16 %v173
    %v342 = vunpack.c.h.b16 %v173
    %v343 = vunpack.c.l.b16 %v174
    %v344 = vunpack.c.h.b16 %v174
    %v345 = vunpack.c.l.b16 %v175
    %v346 = vunpack.c.h.b16 %v175
    %v347 = vunpack.c.l.b16 %v176
    %v348 = vunpack.c.h.b16 %v176
    %v349 = vunpack.c.l.b16 %v177
    %v350 = vunpack.c.h.b16 %v177
    %v351 = vunpack.c.l.b16 %v178
    %v352 = vunpack.c.h.b16 %v178
    %v353 = vunpack.c.l.b16 %v179
    %v354 = vunpack.c.h.b16 %v179
    %v355 = vunpack.c.l.b16 %v180
    %v356 = vunpack.c.h.b16 %v180
    %v357 = vunpack.c.l.b16 %v181
    %v358 = vunpack.c.h.b16 %v181
    %v359 = vunpack.c.l.b16 %v182
    %v360 = vunpack.c.h.b16 %v182
    %v361 = vunpack.c.l.b16 %v183
    %v362 = vunpack.c.h.b16 %v183
    %v363 = vunpack.c.l.b16 %v184
    %v364 = vunpack.c.h.b16 %v184
    %v365 = vunpack.c.l.b16 %v185
    %v366 = vunpack.c.h.b16 %v185
    %v367 = vunpack.c.l.b16 %v186
    %v368 = vunpack.c.h.b16 %v186
    %v369 = vunpack.c.l.b16 %v187
    %v370 = vunpack.c.h.b16 %v187
    %v371 = vunpack.c.l.b16 %v188
    %v372 = vunpack.c.h.b16 %v188
    %v373 = vunpack.c.l.b16 %v189
    %v374 = vunpack.c.h.b16 %v189
    %v375 = vunpack.c.l.b16 %v190
    %v376 = vunpack.c.h.b16 %v190
    %v377 = vunpack.c.l.b16 %v191
    %v378 = vunpack.c.h.b16 %v191
    %v379 = vunpack.c.l.b16 %v192
    %v380 = vunpack.c.h.b16 %v192
    %v381 = vunpack.c.l.b16 %v193
    %v382 = vunpack.c.h.b16 %v193
    %v383 = vunpack.c.l.b16 %v194
    %v384 = vunpack.c.h.b16 %v194
    %v385 = vunpack.c.l.b16 %v195
    %v386 = vunpack.c.h.b16 %v195
    %v387 = vunpack.c.l.b16 %v196
    %v388 = vunpack.c.h.b16 %v196
    %v389 = vunpack.c.l.b16 %v197
    %v390 = vunpack.c.h.b16 %v197
    %v391 = vunpack.c.l.b16 %v198
    %v392 = vunpack.c.h.b16 %v198
    %v393 = vunpack.c.l.b16 %v199
    %v394 = vunpack.c.h.b16 %v199
    %v395 = vunpack.c.l.b16 %v200
    %v396 = vunpack.c.h.b16 %v200
    %v397 = vunpack.c.l.b16 %v201
    %v398 = vunpack.c.h.b16 %v201
    %v399 = vunpack.c.l.b16 %v202
    %v400 = vunpack.c.h.b16 %v202
    %v401 = vunpack.c.l.b16 %v203
    %v402 = vunpack.c.h.b16 %v203
    %v403 = vunpack.c.l.b16 %v204
    %v404 = vunpack.c.h.b16 %v204
    %v405 = vunpack.c.l.b16 %v205
    %v406 = vunpack.c.h.b16 %v205
    %v407 = vunpack.c.l.b16 %v206
    %v408 = vunpack.c.h.b16 %v206
    %v409 = vunpack.c.l.b16 %v207
    %v410 = vunpack.c.h.b16 %v207
    %v411 = vunpack.c.l.b16 %v208
    %v412 = vunpack.c.h.b16 %v208
    %v413 = vunpack.c.l.b16 %v209
    %v414 = vunpack.c.h.b16 %v209
    %v415 = vunpack.c.l.b16 %v210
    %v416 = vunpack.c.h.b16 %v210
    %v417 = vunpack.c.l.b16 %v211
    %v418 = vunpack.c.h.b16 %v211
    %v419 = vunpack.c.l.b16 %v212
    %v420 = vunpack.c.h.b16 %v212
    %v421 = vunpack.c.l.b16 %v213
    %v422 = vunpack.c.h.b16 %v213
    %v423 = vunpack.c.l.b16 %v214
    %v424 = vunpack.c.h.b16 %v214
    %v425 = vunpack.c.l.b16 %v215
    %v426 = vunpack.c.h.b16 %v215
    %v427 = vunpack.c.l.b16 %v216
    %v428 = vunpack.c.h.b16 %v216
    %v429 = vunpack.c.l.b16 %v217
    %v430 = vunpack.c.h.b16 %v217
    %v431 = vunpack.c.l.b16 %v218
    %v432 = vunpack.c.h.b16 %v218
    %v433 = vunpack.c.l.b16 %v219
    %v434 = vunpack.c.h.b16 %v219
    %v435 = vunpack.c.l.b16 %v220
    %v436 = vunpack.c.h.b16 %v220
    %v437 = vunpack.c.l.b16 %v221
    %v438 = vunpack.c.h.b16 %v221
    %v439 = vunpack.c.l.b16 %v222
    %v440 = vunpack.c.h.b16 %v222
    %v441 = vunpack.c.l.b16 %v223
    %v442 = vunpack.c.h.b16 %v223
    %v443 = vunpack.c.l.b16 %v224
    %v444 = vunpack.c.h.b16 %v224
    %v445 = vunpack.c.l.b16 %v225
    %v446 = vunpack.c.h.b16 %v225
    %v447 = vunpack.c.l.b16 %v226
    %v448 = vunpack.c.h.b16 %v226
    %v449 = vunpack.c.l.b16 %v227
    %v450 = vunpack.c.h.b16 %v227
    %v451 = vunpack.c.l.b16 %v228
    %v452 = vunpack.c.h.b16 %v228
    %v453 = vpack.c.b16 %v327, %v325
    %v454 = vpack.c.b16 %v328, %v326
    %v455 = vpack.c.b16 %v331, %v329
    %v456 = vpack.c.b16 %v332, %v330
    %v457 = vpack.c.b16 %v335, %v333
    %v458 = vpack.c.b16 %v336, %v334
    %v459 = vpack.c.b16 %v339, %v337
    %v460 = vpack.c.b16 %v340, %v338
    %v461 = vpack.c.b16 %v343, %v341
    %v462 = vpack.c.b16 %v344, %v342
    %v463 = vpack.c.b16 %v347, %v345
    %v464 = vpack.c.b16 %v348, %v346
    %v465 = vpack.c.b16 %v351, %v349
    %v466 = vpack.c.b16 %v352, %v350
    %v467 = vpack.c.b16 %v355, %v353
    %v468 = vpack.c.b16 %v356, %v354
    %v469 = vpack.c.b16 %v359, %v357
    %v470 = vpack.c.b16 %v360, %v358
    %v471 = vpack.c.b16 %v363, %v361
    %v472 = vpack.c.b16 %v364, %v362
    %v473 = vpack.c.b16 %v367, %v365
    %v474 = vpack.c.b16 %v368, %v366
    %v475 = vpack.c.b16 %v371, %v369
    %v476 = vpack.c.b16 %v372, %v370
    %v477 = vpack.c.b16 %v375, %v373
    %v478 = vpack.c.b16 %v376, %v374
    %v479 = vpack.c.b16 %v379, %v377
    %v480 = vpack.c.b16 %v380, %v378
    %v481 = vpack.c.b16 %v383, %v381
    %v482 = vpack.c.b16 %v384, %v382
    %v483 = vpack.c.b16 %v387, %v385
    %v484 = vpack.c.b16 %v388, %v386
    %v485 = vpack.c.b16 %v391, %v389
    %v486 = vpack.c.b16 %v392, %v390
    %v487 = vpack.c.b16 %v395, %v393
    %v488 = vpack.c.b16 %v396, %v394
    %v489 = vpack.c.b16 %v399, %v397
    %v490 = vpack.c.b16 %v400, %v398
    %v491 = vpack.c.b16 %v403, %v401
    %v492 = vpack.c.b16 %v404, %v402
    %v493 = vpack.c.b16 %v407, %v405
    %v494 = vpack.c.b16 %v408, %v406
    %v495 = vpack.c.b16 %v411, %v409
    %v496 = vpack.c.b16 %v412, %v410
    %v497 = vpack.c.b16 %v415, %v413
    %v498 = vpack.c.b16 %v416, %v414
    %v499 = vpack.c.b16 %v419, %v417
    %v500 = vpack.c.b16 %v420, %v418
    %v501 = vpack.c.b16 %v423, %v421
    %v502 = vpack.c.b16 %v424, %v422
    %v503 = vpack.c.b16 %v427, %v425
    %v504 = vpack.c.b16 %v428, %v426
    %v505 = vpack.c.b16 %v431, %v429
    %v506 = vpack.c.b16 %v432, %v430
    %v507 = vpack.c.b16 %v435, %v433
    %v508 = vpack.c.b16 %v436, %v434
    %v509 = vpack.c.b16 %v439, %v437
    %v510 = vpack.c.b16 %v440, %v438
    %v511 = vpack.c.b16 %v443, %v441
    %v512 = vpack.c.b16 %v444, %v442
    %v513 = vpack.c.b16 %v447, %v445
    %v514 = vpack.c.b16 %v448, %v446
    %v515 = vpack.c.b16 %v451, %v449
    %v516 = vpack.c.b16 %v452, %v450
    %v613 = vunpack.c.l.b16 %v229
    %v614 = vunpack.c.l.b16 %v230
    %v615 = vunpack.c.l.b16 %v231
    %v616 = vunpack.c.l.b16 %v232
    %v617 = vunpack.c.l.b16 %v233
    %v618 = vunpack.c.l.b16 %v234
    %v619 = vunpack.c.l.b16 %v235
    %v620 = vunpack.c.l.b16 %v236
    %v621 = vunpack.c.l.b16 %v237
    %v622 = vunpack.c.l.b16 %v238
    %v623 = vunpack.c.l.b16 %v239
    %v624 = vunpack.c.l.b16 %v240
    %v625 = vunpack.c.l.b16 %v241
    %v626 = vunpack.c.l.b16 %v242
    %v627 = vunpack.c.l.b16 %v243
    %v628 = vunpack.c.l.b16 %v244
    %v629 = vunpack.c.l.b16 %v245
    %v630 = vunpack.c.l.b16 %v246
    %v631 = vunpack.c.l.b16 %v247
    %v632 = vunpack.c.l.b16 %v248
    %v633 = vunpack.c.l.b16 %v249
    %v634 = vunpack.c.l.b16 %v250
    %v635 = vunpack.c.l.b16 %v251
    %v636 = vunpack.c.l.b16 %v252
    %v637 = vunpack.c.l.b16 %v253
    %v638 = vunpack.c.l.b16 %v254
    %v639 = vunpack.c.l.b16 %v255
    %v640 = vunpack.c.l.b16 %v256
    %v641 = vunpack.c.l.b16 %v257
    %v642 = vunpack.c.l.b16 %v258
    %v643 = vunpack.c.l.b16 %v259
    %v644 = vunpack.c.l.b16 %v260
    %v645 = vpack.c.b16 %v614, %v613
    %v646 = vpack.c.b16 %v616, %v615
    %v647 = vpack.c.b16 %v618, %v617
    %v648 = vpack.c.b16 %v620, %v619
    %v649 = vpack.c.b16 %v622, %v621
    %v650 = vpack.c.b16 %v624, %v623
    %v651 = vpack.c.b16 %v626, %v625
    %v652 = vpack.c.b16 %v628, %v627
    %v653 = vpack.c.b16 %v630, %v629
    %v654 = vpack.c.b16 %v632, %v631
    %v655 = vpack.c.b16 %v634, %v633
    %v656 = vpack.c.b16 %v636, %v635
    %v657 = vpack.c.b16 %v638, %v637
    %v658 = vpack.c.b16 %v640, %v639
    %v659 = vpack.c.b16 %v642, %v641
    %v660 = vpack.c.b16 %v644, %v643
    %677 = vmatprep.subr.bf16.mxu0 0
    %678 = vmatpush1.bf16.msra.mxu0 %v645
    %679 = vmatprep.subr.bf16.mxu0 0
    %680 = vmatpush1.bf16.msra.mxu0 %v646
    %681 = vmatprep.subr.bf16.mxu0 0
    %682 = vmatpush1.bf16.msra.mxu0 %v647
    %683 = vmatprep.subr.bf16.mxu0 0
    %684 = vmatpush1.bf16.msra.mxu0 %v648
    %685 = vmatprep.subr.bf16.mxu0 0
    %686 = vmatpush1.bf16.msra.mxu0 %v649
    %687 = vmatprep.subr.bf16.mxu0 0
    %688 = vmatpush1.bf16.msra.mxu0 %v650
    %689 = vmatprep.subr.bf16.mxu0 0
    %690 = vmatpush1.bf16.msra.mxu0 %v651
    %691 = vmatprep.subr.bf16.mxu0 0
    %692 = vmatpush1.bf16.msra.mxu0 %v652
    %693 = vmatprep.subr.bf16.mxu0 0
    %694 = vmatpush1.bf16.msra.mxu0 %v653
    %695 = vmatprep.subr.bf16.mxu0 0
    %696 = vmatpush1.bf16.msra.mxu0 %v654
    %697 = vmatprep.subr.bf16.mxu0 0
    %698 = vmatpush1.bf16.msra.mxu0 %v655
    %699 = vmatprep.subr.bf16.mxu0 0
    %700 = vmatpush1.bf16.msra.mxu0 %v656
    %701 = vmatprep.subr.bf16.mxu0 0
    %702 = vmatpush1.bf16.msra.mxu0 %v657
    %703 = vmatprep.subr.bf16.mxu0 0
    %704 = vmatpush1.bf16.msra.mxu0 %v658
    %705 = vmatprep.subr.bf16.mxu0 0
    %706 = vmatpush1.bf16.msra.mxu0 %v659
    %707 = vmatprep.subr.bf16.mxu0 0
    %708 = vmatpush1.bf16.msra.mxu0 %v660
    %709 = vmatprep.mubr.bf16.mxu0 %v454
    %710 = vmatmul.mubr.bf16.gmra.mrb[0].mxu0 %v453
    %v711 = vpop.f32.mrb[0].mxu0
    %v712 = vadd.f32 0.0, %v711
    %v713 = vpop.f32.mrb[0].mxu0
    %v714 = vpop.f32.mrb[0].mxu0
    %v715 = vadd.f32 0.0, %v714
    %v716 = vpop.f32.mrb[0].mxu0
    %717 = vmatprep.mubr.bf16.mxu0 %v456
    %718 = vmatmul.mubr.bf16.gmra.mrb[0].mxu0 %v455
    %v719 = vpop.f32.mrb[0].mxu0
    %v720 = vadd.f32 0.0, %v719
    %v721 = vpop.f32.mrb[0].mxu0
    %v722 = vpop.f32.mrb[0].mxu0
    %v723 = vadd.f32 0.0, %v722
    %v724 = vpop.f32.mrb[0].mxu0
    %725 = vmatprep.mubr.bf16.mxu0 %v458
    %726 = vmatmul.mubr.bf16.gmra.mrb[0].mxu0 %v457
    %v727 = vpop.f32.mrb[0].mxu0
    %v728 = vadd.f32 0.0, %v727
    %v729 = vpop.f32.mrb[0].mxu0
    %v730 = vpop.f32.mrb[0].mxu0
    %v731 = vadd.f32 0.0, %v730
    %v732 = vpop.f32.mrb[0].mxu0
    %733 = vmatprep.mubr.bf16.mxu0 %v460
    %734 = vmatmul.mubr.bf16.gmra.mrb[0].mxu0 %v459
    %v735 = vpop.f32.mrb[0].mxu0
    %v736 = vadd.f32 0.0, %v735
    %v737 = vpop.f32.mrb[0].mxu0
    %v738 = vpop.f32.mrb[0].mxu0
    %v739 = vadd.f32 0.0, %v738
    %v740 = vpop.f32.mrb[0].mxu0
    %741 = vmatprep.mubr.bf16.mxu0 %v462
    %742 = vmatmul.mubr.bf16.gmra.mrb[0].mxu0 %v461
    %v743 = vpop.f32.mrb[0].mxu0
    %v744 = vadd.f32 0.0, %v743
    %v745 = vpop.f32.mrb[0].mxu0
    %v746 = vpop.f32.mrb[0].mxu0
    %v747 = vadd.f32 0.0, %v746
    %v748 = vpop.f32.mrb[0].mxu0
    %749 = vmatprep.mubr.bf16.mxu0 %v464
    %750 = vmatmul.mubr.bf16.gmra.mrb[0].mxu0 %v463
    %v751 = vpop.f32.mrb[0].mxu0
    %v752 = vadd.f32 0.0, %v751
    %v753 = vpop.f32.mrb[0].mxu0
    %v754 = vpop.f32.mrb[0].mxu0
    %v755 = vadd.f32 0.0, %v754
    %v756 = vpop.f32.mrb[0].mxu0
    %757 = vmatprep.mubr.bf16.mxu0 %v466
    %758 = vmatmul.mubr.bf16.gmra.mrb[0].mxu0 %v465
    %v759 = vpop.f32.mrb[0].mxu0
    %v760 = vadd.f32 0.0, %v759
    %v761 = vpop.f32.mrb[0].mxu0
    %v762 = vpop.f32.mrb[0].mxu0
    %v763 = vadd.f32 0.0, %v762
    %v764 = vpop.f32.mrb[0].mxu0
    %765 = vmatprep.mubr.bf16.mxu0 %v468
    %766 = vmatmul.mubr.bf16.gmra.mrb[0].mxu0 %v467
    %v767 = vpop.f32.mrb[0].mxu0
    %v768 = vadd.f32 0.0, %v767
    %v769 = vpop.f32.mrb[0].mxu0
    %v770 = vpop.f32.mrb[0].mxu0
    %v771 = vadd.f32 0.0, %v770
    %v772 = vpop.f32.mrb[0].mxu0
    %773 = vmatprep.mubr.bf16.mxu0 %v470
    %774 = vmatmul.mubr.bf16.gmra.mrb[0].mxu0 %v469
    %v775 = vpop.f32.mrb[0].mxu0
    %v776 = vadd.f32 0.0, %v775
    %v777 = vpop.f32.mrb[0].mxu0
    %v778 = vpop.f32.mrb[0].mxu0
    %v779 = vadd.f32 0.0, %v778
    %v780 = vpop.f32.mrb[0].mxu0
    %781 = vmatprep.mubr.bf16.mxu0 %v472
    %782 = vmatmul.mubr.bf16.gmra.mrb[0].mxu0 %v471
    %v783 = vpop.f32.mrb[0].mxu0
    %v784 = vadd.f32 0.0, %v783
    %v785 = vpop.f32.mrb[0].mxu0
    %v786 = vpop.f32.mrb[0].mxu0
    %v787 = vadd.f32 0.0, %v786
    %v788 = vpop.f32.mrb[0].mxu0
    %789 = vmatprep.mubr.bf16.mxu0 %v474
    %790 = vmatmul.mubr.bf16.gmra.mrb[0].mxu0 %v473
    %v791 = vpop.f32.mrb[0].mxu0
    %v792 = vadd.f32 0.0, %v791
    %v793 = vpop.f32.mrb[0].mxu0
    %v794 = vpop.f32.mrb[0].mxu0
    %v795 = vadd.f32 0.0, %v794
    %v796 = vpop.f32.mrb[0].mxu0
    %797 = vmatprep.mubr.bf16.mxu0 %v476
    %798 = vmatmul.mubr.bf16.gmra.mrb[0].mxu0 %v475
    %v799 = vpop.f32.mrb[0].mxu0
    %v800 = vadd.f32 0.0, %v799
    %v801 = vpop.f32.mrb[0].mxu0
    %v802 = vpop.f32.mrb[0].mxu0
    %v803 = vadd.f32 0.0, %v802
    %v804 = vpop.f32.mrb[0].mxu0
    %805 = vmatprep.mubr.bf16.mxu0 %v478
    %806 = vmatmul.mubr.bf16.gmra.mrb[0].mxu0 %v477
    %v807 = vpop.f32.mrb[0].mxu0
    %v808 = vadd.f32 0.0, %v807
    %v809 = vpop.f32.mrb[0].mxu0
    %v810 = vpop.f32.mrb[0].mxu0
    %v811 = vadd.f32 0.0, %v810
    %v812 = vpop.f32.mrb[0].mxu0
    %813 = vmatprep.mubr.bf16.mxu0 %v480
    %814 = vmatmul.mubr.bf16.gmra.mrb[0].mxu0 %v479
    %v815 = vpop.f32.mrb[0].mxu0
    %v816 = vadd.f32 0.0, %v815
    %v817 = vpop.f32.mrb[0].mxu0
    %v818 = vpop.f32.mrb[0].mxu0
    %v819 = vadd.f32 0.0, %v818
    %v820 = vpop.f32.mrb[0].mxu0
    %821 = vmatprep.mubr.bf16.mxu0 %v482
    %822 = vmatmul.mubr.bf16.gmra.mrb[0].mxu0 %v481
    %v823 = vpop.f32.mrb[0].mxu0
    %v824 = vadd.f32 0.0, %v823
    %v825 = vpop.f32.mrb[0].mxu0
    %v826 = vpop.f32.mrb[0].mxu0
    %v827 = vadd.f32 0.0, %v826
    %v828 = vpop.f32.mrb[0].mxu0
    %829 = vmatprep.mubr.bf16.mxu0 %v484
    %830 = vmatmul.mubr.bf16.gmra.mrb[0].mxu0 %v483
    %v831 = vpop.f32.mrb[0].mxu0
    %v832 = vadd.f32 0.0, %v831
    %v833 = vpop.f32.mrb[0].mxu0
    %v834 = vpop.f32.mrb[0].mxu0
    %v835 = vadd.f32 0.0, %v834
    %v836 = vpop.f32.mrb[0].mxu0
    %837 = vmatprep.mubr.bf16.mxu0 %v486
    %838 = vmatmul.mubr.bf16.gmra.mrb[0].mxu0 %v485
    %v839 = vpop.f32.mrb[0].mxu0
    %v840 = vadd.f32 0.0, %v839
    %v841 = vpop.f32.mrb[0].mxu0
    %v842 = vpop.f32.mrb[0].mxu0
    %v843 = vadd.f32 0.0, %v842
    %v844 = vpop.f32.mrb[0].mxu0
    %845 = vmatprep.mubr.bf16.mxu0 %v488
    %846 = vmatmul.mubr.bf16.gmra.mrb[0].mxu0 %v487
    %v847 = vpop.f32.mrb[0].mxu0
    %v848 = vadd.f32 0.0, %v847
    %v849 = vpop.f32.mrb[0].mxu0
    %v850 = vpop.f32.mrb[0].mxu0
    %v851 = vadd.f32 0.0, %v850
    %v852 = vpop.f32.mrb[0].mxu0
    %853 = vmatprep.mubr.bf16.mxu0 %v490
    %854 = vmatmul.mubr.bf16.gmra.mrb[0].mxu0 %v489
    %v855 = vpop.f32.mrb[0].mxu0
    %v856 = vadd.f32 0.0, %v855
    %v857 = vpop.f32.mrb[0].mxu0
    %v858 = vpop.f32.mrb[0].mxu0
    %v859 = vadd.f32 0.0, %v858
    %v860 = vpop.f32.mrb[0].mxu0
    %861 = vmatprep.mubr.bf16.mxu0 %v492
    %862 = vmatmul.mubr.bf16.gmra.mrb[0].mxu0 %v491
    %v863 = vpop.f32.mrb[0].mxu0
    %v864 = vadd.f32 0.0, %v863
    %v865 = vpop.f32.mrb[0].mxu0
    %v866 = vpop.f32.mrb[0].mxu0
    %v867 = vadd.f32 0.0, %v866
    %v868 = vpop.f32.mrb[0].mxu0
    %869 = vmatprep.mubr.bf16.mxu0 %v494
    %870 = vmatmul.mubr.bf16.gmra.mrb[0].mxu0 %v493
    %v871 = vpop.f32.mrb[0].mxu0
    %v872 = vadd.f32 0.0, %v871
    %v873 = vpop.f32.mrb[0].mxu0
    %v874 = vpop.f32.mrb[0].mxu0
    %v875 = vadd.f32 0.0, %v874
    %v876 = vpop.f32.mrb[0].mxu0
    %877 = vmatprep.mubr.bf16.mxu0 %v496
    %878 = vmatmul.mubr.bf16.gmra.mrb[0].mxu0 %v495
    %v879 = vpop.f32.mrb[0].mxu0
    %v880 = vadd.f32 0.0, %v879
    %v881 = vpop.f32.mrb[0].mxu0
    %v882 = vpop.f32.mrb[0].mxu0
    %v883 = vadd.f32 0.0, %v882
    %v884 = vpop.f32.mrb[0].mxu0
    %885 = vmatprep.mubr.bf16.mxu0 %v498
    %886 = vmatmul.mubr.bf16.gmra.mrb[0].mxu0 %v497
    %v887 = vpop.f32.mrb[0].mxu0
    %v888 = vadd.f32 0.0, %v887
    %v889 = vpop.f32.mrb[0].mxu0
    %v890 = vpop.f32.mrb[0].mxu0
    %v891 = vadd.f32 0.0, %v890
    %v892 = vpop.f32.mrb[0].mxu0
    %893 = vmatprep.mubr.bf16.mxu0 %v500
    %894 = vmatmul.mubr.bf16.gmra.mrb[0].mxu0 %v499
    %v895 = vpop.f32.mrb[0].mxu0
    %v896 = vadd.f32 0.0, %v895
    %v897 = vpop.f32.mrb[0].mxu0
    %v898 = vpop.f32.mrb[0].mxu0
    %v899 = vadd.f32 0.0, %v898
    %v900 = vpop.f32.mrb[0].mxu0
    %901 = vmatprep.mubr.bf16.mxu0 %v502
    %902 = vmatmul.mubr.bf16.gmra.mrb[0].mxu0 %v501
    %v903 = vpop.f32.mrb[0].mxu0
    %v904 = vadd.f32 0.0, %v903
    %v905 = vpop.f32.mrb[0].mxu0
    %v906 = vpop.f32.mrb[0].mxu0
    %v907 = vadd.f32 0.0, %v906
    %v908 = vpop.f32.mrb[0].mxu0
    %909 = vmatprep.mubr.bf16.mxu0 %v504
    %910 = vmatmul.mubr.bf16.gmra.mrb[0].mxu0 %v503
    %v911 = vpop.f32.mrb[0].mxu0
    %v912 = vadd.f32 0.0, %v911
    %v913 = vpop.f32.mrb[0].mxu0
    %v914 = vpop.f32.mrb[0].mxu0
    %v915 = vadd.f32 0.0, %v914
    %v916 = vpop.f32.mrb[0].mxu0
    %917 = vmatprep.mubr.bf16.mxu0 %v506
    %918 = vmatmul.mubr.bf16.gmra.mrb[0].mxu0 %v505
    %v919 = vpop.f32.mrb[0].mxu0
    %v920 = vadd.f32 0.0, %v919
    %v921 = vpop.f32.mrb[0].mxu0
    %v922 = vpop.f32.mrb[0].mxu0
    %v923 = vadd.f32 0.0, %v922
    %v924 = vpop.f32.mrb[0].mxu0
    %925 = vmatprep.mubr.bf16.mxu0 %v508
    %926 = vmatmul.mubr.bf16.gmra.mrb[0].mxu0 %v507
    %v927 = vpop.f32.mrb[0].mxu0
    %v928 = vadd.f32 0.0, %v927
    %v929 = vpop.f32.mrb[0].mxu0
    %v930 = vpop.f32.mrb[0].mxu0
    %v931 = vadd.f32 0.0, %v930
    %v932 = vpop.f32.mrb[0].mxu0
    %933 = vmatprep.mubr.bf16.mxu0 %v510
    %934 = vmatmul.mubr.bf16.gmra.mrb[0].mxu0 %v509
    %v935 = vpop.f32.mrb[0].mxu0
    %v936 = vadd.f32 0.0, %v935
    %v937 = vpop.f32.mrb[0].mxu0
    %v938 = vpop.f32.mrb[0].mxu0
    %v939 = vadd.f32 0.0, %v938
    %v940 = vpop.f32.mrb[0].mxu0
    %941 = vmatprep.mubr.bf16.mxu0 %v512
    %942 = vmatmul.mubr.bf16.gmra.mrb[0].mxu0 %v511
    %v943 = vpop.f32.mrb[0].mxu0
    %v944 = vadd.f32 0.0, %v943
    %v945 = vpop.f32.mrb[0].mxu0
    %v946 = vpop.f32.mrb[0].mxu0
    %v947 = vadd.f32 0.0, %v946
    %v948 = vpop.f32.mrb[0].mxu0
    %949 = vmatprep.mubr.bf16.mxu0 %v514
    %950 = vmatmul.mubr.bf16.gmra.mrb[0].mxu0 %v513
    %v951 = vpop.f32.mrb[0].mxu0
    %v952 = vadd.f32 0.0, %v951
    %v953 = vpop.f32.mrb[0].mxu0
    %v954 = vpop.f32.mrb[0].mxu0
    %v955 = vadd.f32 0.0, %v954
    %v956 = vpop.f32.mrb[0].mxu0
    %957 = vmatprep.mubr.bf16.mxu0 %v516
    %958 = vmatmul.mubr.bf16.gmra.mrb[0].mxu0 %v515
    %v959 = vpop.f32.mrb[0].mxu0
    %v960 = vadd.f32 0.0, %v959
    %v961 = vpop.f32.mrb[0].mxu0
    %v962 = vpop.f32.mrb[0].mxu0
    %v963 = vadd.f32 0.0, %v962
    %v964 = vpop.f32.mrb[0].mxu0
    %965 = vdwg.mxu0
    %v966 = vadd.f32 %v101, %v712
    %v967 = vadd.f32 %v102, %v715
    %v968 = vadd.f32 %v103, %v720
    %v969 = vadd.f32 %v104, %v723
    %v970 = vadd.f32 %v105, %v728
    %v971 = vadd.f32 %v106, %v731
    %v972 = vadd.f32 %v107, %v736
    %v973 = vadd.f32 %v108, %v739
    %v974 = vadd.f32 %v109, %v744
    %v975 = vadd.f32 %v110, %v747
    %v976 = vadd.f32 %v111, %v752
    %v977 = vadd.f32 %v112, %v755
    %v978 = vadd.f32 %v113, %v760
    %v979 = vadd.f32 %v114, %v763
    %v980 = vadd.f32 %v115, %v768
    %v981 = vadd.f32 %v116, %v771
    %v982 = vadd.f32 %v117, %v776
    %v983 = vadd.f32 %v118, %v779
    %v984 = vadd.f32 %v119, %v784
    %v985 = vadd.f32 %v120, %v787
    %v986 = vadd.f32 %v121, %v792
    %v987 = vadd.f32 %v122, %v795
    %v988 = vadd.f32 %v123, %v800
    %v989 = vadd.f32 %v124, %v803
    %v990 = vadd.f32 %v125, %v808
    %v991 = vadd.f32 %v126, %v811
    %v992 = vadd.f32 %v127, %v816
    %v993 = vadd.f32 %v128, %v819
    %v994 = vadd.f32 %v129, %v824
    %v995 = vadd.f32 %v130, %v827
    %v996 = vadd.f32 %v131, %v832
    %v997 = vadd.f32 %v132, %v835
    %v998 = vadd.f32 %v133, %v840
    %v999 = vadd.f32 %v134, %v843
    %v1000 = vadd.f32 %v135, %v848
    %v1001 = vadd.f32 %v136, %v851
    %v1002 = vadd.f32 %v137, %v856
    %v1003 = vadd.f32 %v138, %v859
    %v1004 = vadd.f32 %v139, %v864
    %v1005 = vadd.f32 %v140, %v867
    %v1006 = vadd.f32 %v141, %v872
    %v1007 = vadd.f32 %v142, %v875
    %v1008 = vadd.f32 %v143, %v880
    %v1009 = vadd.f32 %v144, %v883
    %v1010 = vadd.f32 %v145, %v888
    %v1011 = vadd.f32 %v146, %v891
    %v1012 = vadd.f32 %v147, %v896
    %v1013 = vadd.f32 %v148, %v899
    %v1014 = vadd.f32 %v149, %v904
    %v1015 = vadd.f32 %v150, %v907
    %v1016 = vadd.f32 %v151, %v912
    %v1017 = vadd.f32 %v152, %v915
    %v1018 = vadd.f32 %v153, %v920
    %v1019 = vadd.f32 %v154, %v923
    %v1020 = vadd.f32 %v155, %v928
    %v1021 = vadd.f32 %v156, %v931
    %v1022 = vadd.f32 %v157, %v936
    %v1023 = vadd.f32 %v158, %v939
    %v1024 = vadd.f32 %v159, %v944
    %v1025 = vadd.f32 %v160, %v947
    %v1026 = vadd.f32 %v161, %v952
    %v1027 = vadd.f32 %v162, %v955
    %v1028 = vadd.f32 %v163, %v960
    %v1029 = vadd.f32 %v164, %v963
    %vm1030 = vcmask 523264
    %1031 = vst.msk [vmem:[#allocation2] sm:$0xff] %vm1030, %v966
    %1032 = vst.msk [vmem:[#allocation2 + $0x8] sm:$0xff] %vm1030, %v967
    %1033 = vst.msk [vmem:[#allocation2 + $0x10] sm:$0xff] %vm1030, %v968
    %1034 = vst.msk [vmem:[#allocation2 + $0x18] sm:$0xff] %vm1030, %v969
    %1035 = vst.msk [vmem:[#allocation2 + $0x20] sm:$0xff] %vm1030, %v970
    %1036 = vst.msk [vmem:[#allocation2 + $0x28] sm:$0xff] %vm1030, %v971
    %1037 = vst.msk [vmem:[#allocation2 + $0x30] sm:$0xff] %vm1030, %v972
    %1038 = vst.msk [vmem:[#allocation2 + $0x38] sm:$0xff] %vm1030, %v973
    %1039 = vst.msk [vmem:[#allocation2 + $0x40] sm:$0xff] %vm1030, %v974
    %1040 = vst.msk [vmem:[#allocation2 + $0x48] sm:$0xff] %vm1030, %v975
    %1041 = vst.msk [vmem:[#allocation2 + $0x50] sm:$0xff] %vm1030, %v976
    %1042 = vst.msk [vmem:[#allocation2 + $0x58] sm:$0xff] %vm1030, %v977
    %1043 = vst.msk [vmem:[#allocation2 + $0x60] sm:$0xff] %vm1030, %v978
    %1044 = vst.msk [vmem:[#allocation2 + $0x68] sm:$0xff] %vm1030, %v979
    %1045 = vst.msk [vmem:[#allocation2 + $0x70] sm:$0xff] %vm1030, %v980
    %1046 = vst.msk [vmem:[#allocation2 + $0x78] sm:$0xff] %vm1030, %v981
    %1047 = vst.msk [vmem:[#allocation2 + $0x80] sm:$0xff] %vm1030, %v982
    %1048 = vst.msk [vmem:[#allocation2 + $0x88] sm:$0xff] %vm1030, %v983
    %1049 = vst.msk [vmem:[#allocation2 + $0x90] sm:$0xff] %vm1030, %v984
    %1050 = vst.msk [vmem:[#allocation2 + $0x98] sm:$0xff] %vm1030, %v985
    %1051 = vst.msk [vmem:[#allocation2 + $0xa0] sm:$0xff] %vm1030, %v986
    %1052 = vst.msk [vmem:[#allocation2 + $0xa8] sm:$0xff] %vm1030, %v987
    %1053 = vst.msk [vmem:[#allocation2 + $0xb0] sm:$0xff] %vm1030, %v988
    %1054 = vst.msk [vmem:[#allocation2 + $0xb8] sm:$0xff] %vm1030, %v989
    %1055 = vst.msk [vmem:[#allocation2 + $0xc0] sm:$0xff] %vm1030, %v990
    %1056 = vst.msk [vmem:[#allocation2 + $0xc8] sm:$0xff] %vm1030, %v991
    %1057 = vst.msk [vmem:[#allocation2 + $0xd0] sm:$0xff] %vm1030, %v992
    %1058 = vst.msk [vmem:[#allocation2 + $0xd8] sm:$0xff] %vm1030, %v993
    %1059 = vst.msk [vmem:[#allocation2 + $0xe0] sm:$0xff] %vm1030, %v994
    %1060 = vst.msk [vmem:[#allocation2 + $0xe8] sm:$0xff] %vm1030, %v995
    %1061 = vst.msk [vmem:[#allocation2 + $0xf0] sm:$0xff] %vm1030, %v996
    %1062 = vst.msk [vmem:[#allocation2 + $0xf8] sm:$0xff] %vm1030, %v997
    %1063 = vst.msk [vmem:[#allocation2 + $0x100] sm:$0xff] %vm1030, %v998
    %1064 = vst.msk [vmem:[#allocation2 + $0x108] sm:$0xff] %vm1030, %v999
    %1065 = vst.msk [vmem:[#allocation2 + $0x110] sm:$0xff] %vm1030, %v1000
    %1066 = vst.msk [vmem:[#allocation2 + $0x118] sm:$0xff] %vm1030, %v1001
    %1067 = vst.msk [vmem:[#allocation2 + $0x120] sm:$0xff] %vm1030, %v1002
    %1068 = vst.msk [vmem:[#allocation2 + $0x128] sm:$0xff] %vm1030, %v1003
    %1069 = vst.msk [vmem:[#allocation2 + $0x130] sm:$0xff] %vm1030, %v1004
    %1070 = vst.msk [vmem:[#allocation2 + $0x138] sm:$0xff] %vm1030, %v1005
    %1071 = vst.msk [vmem:[#allocation2 + $0x140] sm:$0xff] %vm1030, %v1006
    %1072 = vst.msk [vmem:[#allocation2 + $0x148] sm:$0xff] %vm1030, %v1007
    %1073 = vst.msk [vmem:[#allocation2 + $0x150] sm:$0xff] %vm1030, %v1008
    %1074 = vst.msk [vmem:[#allocation2 + $0x158] sm:$0xff] %vm1030, %v1009
    %1075 = vst.msk [vmem:[#allocation2 + $0x160] sm:$0xff] %vm1030, %v1010
    %1076 = vst.msk [vmem:[#allocation2 + $0x168] sm:$0xff] %vm1030, %v1011
    %1077 = vst.msk [vmem:[#allocation2 + $0x170] sm:$0xff] %vm1030, %v1012
    %1078 = vst.msk [vmem:[#allocation2 + $0x178] sm:$0xff] %vm1030, %v1013
    %1079 = vst.msk [vmem:[#allocation2 + $0x180] sm:$0xff] %vm1030, %v1014
    %1080 = vst.msk [vmem:[#allocation2 + $0x188] sm:$0xff] %vm1030, %v1015
    %1081 = vst.msk [vmem:[#allocation2 + $0x190] sm:$0xff] %vm1030, %v1016
    %1082 = vst.msk [vmem:[#allocation2 + $0x198] sm:$0xff] %vm1030, %v1017
    %1083 = vst.msk [vmem:[#allocation2 + $0x1a0] sm:$0xff] %vm1030, %v1018
    %1084 = vst.msk [vmem:[#allocation2 + $0x1a8] sm:$0xff] %vm1030, %v1019
    %1085 = vst.msk [vmem:[#allocation2 + $0x1b0] sm:$0xff] %vm1030, %v1020
    %1086 = vst.msk [vmem:[#allocation2 + $0x1b8] sm:$0xff] %vm1030, %v1021
    %1087 = vst.msk [vmem:[#allocation2 + $0x1c0] sm:$0xff] %vm1030, %v1022
    %1088 = vst.msk [vmem:[#allocation2 + $0x1c8] sm:$0xff] %vm1030, %v1023
    %1089 = vst.msk [vmem:[#allocation2 + $0x1d0] sm:$0xff] %vm1030, %v1024
    %1090 = vst.msk [vmem:[#allocation2 + $0x1d8] sm:$0xff] %vm1030, %v1025
    %1091 = vst.msk [vmem:[#allocation2 + $0x1e0] sm:$0xff] %vm1030, %v1026
    %1092 = vst.msk [vmem:[#allocation2 + $0x1e8] sm:$0xff] %vm1030, %v1027
    %1093 = vst.msk [vmem:[#allocation2 + $0x1f0] sm:$0xff] %vm1030, %v1028
    %1094 = vst.msk [vmem:[#allocation2 + $0x1f8] sm:$0xff] %vm1030, %v1029
    // Predicated region
    $region26: #{tpu_custom_call.1} parent=1 // pred_check
      %p1095 = pneg %p32
    $region27: #{tpu_custom_call.1} parent=1 // pred_check_branch
      %1097 = sbr.rel (%p1095) target = $region29
    $region28: #{tpu_custom_call.1} parent=1 // pred_region
      %v1098 = vld [vmem:[#allocation2] sm:$0xff]
      %v1099 = vld [vmem:[#allocation2 + $0x8] sm:$0xff]
      %v1100 = vld [vmem:[#allocation2 + $0x10] sm:$0xff]
      %v1101 = vld [vmem:[#allocation2 + $0x18] sm:$0xff]
      %v1102 = vld [vmem:[#allocation2 + $0x20] sm:$0xff]
      %v1103 = vld [vmem:[#allocation2 + $0x28] sm:$0xff]
      %v1104 = vld [vmem:[#allocation2 + $0x30] sm:$0xff]
      %v1105 = vld [vmem:[#allocation2 + $0x38] sm:$0xff]
      %v1106 = vld [vmem:[#allocation2 + $0x40] sm:$0xff]
      %v1107 = vld [vmem:[#allocation2 + $0x48] sm:$0xff]
      %v1108 = vld [vmem:[#allocation2 + $0x50] sm:$0xff]
      %v1109 = vld [vmem:[#allocation2 + $0x58] sm:$0xff]
      %v1110 = vld [vmem:[#allocation2 + $0x60] sm:$0xff]
      %v1111 = vld [vmem:[#allocation2 + $0x68] sm:$0xff]
      %v1112 = vld [vmem:[#allocation2 + $0x70] sm:$0xff]
      %v1113 = vld [vmem:[#allocation2 + $0x78] sm:$0xff]
      %v1114 = vld [vmem:[#allocation2 + $0x80] sm:$0xff]
      %v1115 = vld [vmem:[#allocation2 + $0x88] sm:$0xff]
      %v1116 = vld [vmem:[#allocation2 + $0x90] sm:$0xff]
      %v1117 = vld [vmem:[#allocation2 + $0x98] sm:$0xff]
      %v1118 = vld [vmem:[#allocation2 + $0xa0] sm:$0xff]
      %v1119 = vld [vmem:[#allocation2 + $0xa8] sm:$0xff]
      %v1120 = vld [vmem:[#allocation2 + $0xb0] sm:$0xff]
      %v1121 = vld [vmem:[#allocation2 + $0xb8] sm:$0xff]
      %v1122 = vld [vmem:[#allocation2 + $0xc0] sm:$0xff]
      %v1123 = vld [vmem:[#allocation2 + $0xc8] sm:$0xff]
      %v1124 = vld [vmem:[#allocation2 + $0xd0] sm:$0xff]
      %v1125 = vld [vmem:[#allocation2 + $0xd8] sm:$0xff]
      %v1126 = vld [vmem:[#allocation2 + $0xe0] sm:$0xff]
      %v1127 = vld [vmem:[#allocation2 + $0xe8] sm:$0xff]
      %v1128 = vld [vmem:[#allocation2 + $0xf0] sm:$0xff]
      %v1129 = vld [vmem:[#allocation2 + $0xf8] sm:$0xff]
      %v1130 = vld [vmem:[#allocation2 + $0x100] sm:$0xff]
      %v1131 = vld [vmem:[#allocation2 + $0x108] sm:$0xff]
      %v1132 = vld [vmem:[#allocation2 + $0x110] sm:$0xff]
      %v1133 = vld [vmem:[#allocation2 + $0x118] sm:$0xff]
      %v1134 = vld [vmem:[#allocation2 + $0x120] sm:$0xff]
      %v1135 = vld [vmem:[#allocation2 + $0x128] sm:$0xff]
      %v1136 = vld [vmem:[#allocation2 + $0x130] sm:$0xff]
      %v1137 = vld [vmem:[#allocation2 + $0x138] sm:$0xff]
      %v1138 = vld [vmem:[#allocation2 + $0x140] sm:$0xff]
      %v1139 = vld [vmem:[#allocation2 + $0x148] sm:$0xff]
      %v1140 = vld [vmem:[#allocation2 + $0x150] sm:$0xff]
      %v1141 = vld [vmem:[#allocation2 + $0x158] sm:$0xff]
      %v1142 = vld [vmem:[#allocation2 + $0x160] sm:$0xff]
      %v1143 = vld [vmem:[#allocation2 + $0x168] sm:$0xff]
      %v1144 = vld [vmem:[#allocation2 + $0x170] sm:$0xff]
      %v1145 = vld [vmem:[#allocation2 + $0x178] sm:$0xff]
      %v1146 = vld [vmem:[#allocation2 + $0x180] sm:$0xff]
      %v1147 = vld [vmem:[#allocation2 + $0x188] sm:$0xff]
      %v1148 = vld [vmem:[#allocation2 + $0x190] sm:$0xff]
      %v1149 = vld [vmem:[#allocation2 + $0x198] sm:$0xff]
      %v1150 = vld [vmem:[#allocation2 + $0x1a0] sm:$0xff]
      %v1151 = vld [vmem:[#allocation2 + $0x1a8] sm:$0xff]
      %v1152 = vld [vmem:[#allocation2 + $0x1b0] sm:$0xff]
      %v1153 = vld [vmem:[#allocation2 + $0x1b8] sm:$0xff]
      %v1154 = vld [vmem:[#allocation2 + $0x1c0] sm:$0xff]
      %v1155 = vld [vmem:[#allocation2 + $0x1c8] sm:$0xff]
      %v1156 = vld [vmem:[#allocation2 + $0x1d0] sm:$0xff]
      %v1157 = vld [vmem:[#allocation2 + $0x1d8] sm:$0xff]
      %v1158 = vld [vmem:[#allocation2 + $0x1e0] sm:$0xff]
      %v1159 = vld [vmem:[#allocation2 + $0x1e8] sm:$0xff]
      %v1160 = vld [vmem:[#allocation2 + $0x1f0] sm:$0xff]
      %v1161 = vld [vmem:[#allocation2 + $0x1f8] sm:$0xff]
      %v1162 = vld [vmem:[%s2] sm:$0x1]
      %v1164 = vlaneseq
      %v1165 = vshrl.u32 %v1164, 7
      %v1166 = vsub.s32 0, %v1165
      %v1167 = vrot.slane %v1162, %v1166
      %v1169 = vmul.f32 %v1098, %v1167
      %v1170 = vmul.f32 %v1099, %v1167
      %v1171 = vmul.f32 %v1100, %v1167
      %v1172 = vmul.f32 %v1101, %v1167
      %v1173 = vmul.f32 %v1102, %v1167
      %v1174 = vmul.f32 %v1103, %v1167
      %v1175 = vmul.f32 %v1104, %v1167
      %v1176 = vmul.f32 %v1105, %v1167
      %v1177 = vmul.f32 %v1106, %v1167
      %v1178 = vmul.f32 %v1107, %v1167
      %v1179 = vmul.f32 %v1108, %v1167
      %v1180 = vmul.f32 %v1109, %v1167
      %v1181 = vmul.f32 %v1110, %v1167
      %v1182 = vmul.f32 %v1111, %v1167
      %v1183 = vmul.f32 %v1112, %v1167
      %v1184 = vmul.f32 %v1113, %v1167
      %v1185 = vmul.f32 %v1114, %v1167
      %v1186 = vmul.f32 %v1115, %v1167
      %v1187 = vmul.f32 %v1116, %v1167
      %v1188 = vmul.f32 %v1117, %v1167
      %v1189 = vmul.f32 %v1118, %v1167
      %v1190 = vmul.f32 %v1119, %v1167
      %v1191 = vmul.f32 %v1120, %v1167
      %v1192 = vmul.f32 %v1121, %v1167
      %v1193 = vmul.f32 %v1122, %v1167
      %v1194 = vmul.f32 %v1123, %v1167
      %v1195 = vmul.f32 %v1124, %v1167
      %v1196 = vmul.f32 %v1125, %v1167
      %v1197 = vmul.f32 %v1126, %v1167
      %v1198 = vmul.f32 %v1127, %v1167
      %v1199 = vmul.f32 %v1128, %v1167
      %v1200 = vmul.f32 %v1129, %v1167
      %v1201 = vmul.f32 %v1130, %v1167
      %v1202 = vmul.f32 %v1131, %v1167
      %v1203 = vmul.f32 %v1132, %v1167
      %v1204 = vmul.f32 %v1133, %v1167
      %v1205 = vmul.f32 %v1134, %v1167
      %v1206 = vmul.f32 %v1135, %v1167
      %v1207 = vmul.f32 %v1136, %v1167
      %v1208 = vmul.f32 %v1137, %v1167
      %v1209 = vmul.f32 %v1138, %v1167
      %v1210 = vmul.f32 %v1139, %v1167
      %v1211 = vmul.f32 %v1140, %v1167
      %v1212 = vmul.f32 %v1141, %v1167
      %v1213 = vmul.f32 %v1142, %v1167
      %v1214 = vmul.f32 %v1143, %v1167
      %v1215 = vmul.f32 %v1144, %v1167
      %v1216 = vmul.f32 %v1145, %v1167
      %v1217 = vmul.f32 %v1146, %v1167
      %v1218 = vmul.f32 %v1147, %v1167
      %v1219 = vmul.f32 %v1148, %v1167
      %v1220 = vmul.f32 %v1149, %v1167
      %v1221 = vmul.f32 %v1150, %v1167
      %v1222 = vmul.f32 %v1151, %v1167
      %v1223 = vmul.f32 %v1152, %v1167
      %v1224 = vmul.f32 %v1153, %v1167
      %v1225 = vmul.f32 %v1154, %v1167
      %v1226 = vmul.f32 %v1155, %v1167
      %v1227 = vmul.f32 %v1156, %v1167
      %v1228 = vmul.f32 %v1157, %v1167
      %v1229 = vmul.f32 %v1158, %v1167
      %v1230 = vmul.f32 %v1159, %v1167
      %v1231 = vmul.f32 %v1160, %v1167
      %v1232 = vmul.f32 %v1161, %v1167
      %v1233 = vld [vmem:[%s3] sm:$0x1]
      %v1235 = vlaneseq
      %v1236 = vshrl.u32 %v1235, 7
      %v1237 = vsub.s32 0, %v1236
      %v1238 = vrot.slane %v1233, %v1237
      %v1240 = vadd.f32 %v1169, %v1238
      %v1241 = vadd.f32 %v1170, %v1238
      %v1242 = vadd.f32 %v1171, %v1238
      %v1243 = vadd.f32 %v1172, %v1238
      %v1244 = vadd.f32 %v1173, %v1238
      %v1245 = vadd.f32 %v1174, %v1238
      %v1246 = vadd.f32 %v1175, %v1238
      %v1247 = vadd.f32 %v1176, %v1238
      %v1248 = vadd.f32 %v1177, %v1238
      %v1249 = vadd.f32 %v1178, %v1238
      %v1250 = vadd.f32 %v1179, %v1238
      %v1251 = vadd.f32 %v1180, %v1238
      %v1252 = vadd.f32 %v1181, %v1238
      %v1253 = vadd.f32 %v1182, %v1238
      %v1254 = vadd.f32 %v1183, %v1238
      %v1255 = vadd.f32 %v1184, %v1238
      %v1256 = vadd.f32 %v1185, %v1238
      %v1257 = vadd.f32 %v1186, %v1238
      %v1258 = vadd.f32 %v1187, %v1238
      %v1259 = vadd.f32 %v1188, %v1238
      %v1260 = vadd.f32 %v1189, %v1238
      %v1261 = vadd.f32 %v1190, %v1238
      %v1262 = vadd.f32 %v1191, %v1238
      %v1263 = vadd.f32 %v1192, %v1238
      %v1264 = vadd.f32 %v1193, %v1238
      %v1265 = vadd.f32 %v1194, %v1238
      %v1266 = vadd.f32 %v1195, %v1238
      %v1267 = vadd.f32 %v1196, %v1238
      %v1268 = vadd.f32 %v1197, %v1238
      %v1269 = vadd.f32 %v1198, %v1238
      %v1270 = vadd.f32 %v1199, %v1238
      %v1271 = vadd.f32 %v1200, %v1238
      %v1272 = vadd.f32 %v1201, %v1238
      %v1273 = vadd.f32 %v1202, %v1238
      %v1274 = vadd.f32 %v1203, %v1238
      %v1275 = vadd.f32 %v1204, %v1238
      %v1276 = vadd.f32 %v1205, %v1238
      %v1277 = vadd.f32 %v1206, %v1238
      %v1278 = vadd.f32 %v1207, %v1238
      %v1279 = vadd.f32 %v1208, %v1238
      %v1280 = vadd.f32 %v1209, %v1238
      %v1281 = vadd.f32 %v1210, %v1238
      %v1282 = vadd.f32 %v1211, %v1238
      %v1283 = vadd.f32 %v1212, %v1238
      %v1284 = vadd.f32 %v1213, %v1238
      %v1285 = vadd.f32 %v1214, %v1238
      %v1286 = vadd.f32 %v1215, %v1238
      %v1287 = vadd.f32 %v1216, %v1238
      %v1288 = vadd.f32 %v1217, %v1238
      %v1289 = vadd.f32 %v1218, %v1238
      %v1290 = vadd.f32 %v1219, %v1238
      %v1291 = vadd.f32 %v1220, %v1238
      %v1292 = vadd.f32 %v1221, %v1238
      %v1293 = vadd.f32 %v1222, %v1238
      %v1294 = vadd.f32 %v1223, %v1238
      %v1295 = vadd.f32 %v1224, %v1238
      %v1296 = vadd.f32 %v1225, %v1238
      %v1297 = vadd.f32 %v1226, %v1238
      %v1298 = vadd.f32 %v1227, %v1238
      %v1299 = vadd.f32 %v1228, %v1238
      %v1300 = vadd.f32 %v1229, %v1238
      %v1301 = vadd.f32 %v1230, %v1238
      %v1302 = vadd.f32 %v1231, %v1238
      %v1303 = vadd.f32 %v1232, %v1238
      %v1304 = vmax.f32 %v1240, 0.0
      %v1305 = vmax.f32 %v1241, 0.0
      %v1306 = vmax.f32 %v1242, 0.0
      %v1307 = vmax.f32 %v1243, 0.0
      %v1308 = vmax.f32 %v1244, 0.0
      %v1309 = vmax.f32 %v1245, 0.0
      %v1310 = vmax.f32 %v1246, 0.0
      %v1311 = vmax.f32 %v1247, 0.0
      %v1312 = vmax.f32 %v1248, 0.0
      %v1313 = vmax.f32 %v1249, 0.0
      %v1314 = vmax.f32 %v1250, 0.0
      %v1315 = vmax.f32 %v1251, 0.0
      %v1316 = vmax.f32 %v1252, 0.0
      %v1317 = vmax.f32 %v1253, 0.0
      %v1318 = vmax.f32 %v1254, 0.0
      %v1319 = vmax.f32 %v1255, 0.0
      %v1320 = vmax.f32 %v1256, 0.0
      %v1321 = vmax.f32 %v1257, 0.0
      %v1322 = vmax.f32 %v1258, 0.0
      %v1323 = vmax.f32 %v1259, 0.0
      %v1324 = vmax.f32 %v1260, 0.0
      %v1325 = vmax.f32 %v1261, 0.0
      %v1326 = vmax.f32 %v1262, 0.0
      %v1327 = vmax.f32 %v1263, 0.0
      %v1328 = vmax.f32 %v1264, 0.0
      %v1329 = vmax.f32 %v1265, 0.0
      %v1330 = vmax.f32 %v1266, 0.0
      %v1331 = vmax.f32 %v1267, 0.0
      %v1332 = vmax.f32 %v1268, 0.0
      %v1333 = vmax.f32 %v1269, 0.0
      %v1334 = vmax.f32 %v1270, 0.0
      %v1335 = vmax.f32 %v1271, 0.0
      %v1336 = vmax.f32 %v1272, 0.0
      %v1337 = vmax.f32 %v1273, 0.0
      %v1338 = vmax.f32 %v1274, 0.0
      %v1339 = vmax.f32 %v1275, 0.0
      %v1340 = vmax.f32 %v1276, 0.0
      %v1341 = vmax.f32 %v1277, 0.0
      %v1342 = vmax.f32 %v1278, 0.0
      %v1343 = vmax.f32 %v1279, 0.0
      %v1344 = vmax.f32 %v1280, 0.0
      %v1345 = vmax.f32 %v1281, 0.0
      %v1346 = vmax.f32 %v1282, 0.0
      %v1347 = vmax.f32 %v1283, 0.0
      %v1348 = vmax.f32 %v1284, 0.0
      %v1349 = vmax.f32 %v1285, 0.0
      %v1350 = vmax.f32 %v1286, 0.0
      %v1351 = vmax.f32 %v1287, 0.0
      %v1352 = vmax.f32 %v1288, 0.0
      %v1353 = vmax.f32 %v1289, 0.0
      %v1354 = vmax.f32 %v1290, 0.0
      %v1355 = vmax.f32 %v1291, 0.0
      %v1356 = vmax.f32 %v1292, 0.0
      %v1357 = vmax.f32 %v1293, 0.0
      %v1358 = vmax.f32 %v1294, 0.0
      %v1359 = vmax.f32 %v1295, 0.0
      %v1360 = vmax.f32 %v1296, 0.0
      %v1361 = vmax.f32 %v1297, 0.0
      %v1362 = vmax.f32 %v1298, 0.0
      %v1363 = vmax.f32 %v1299, 0.0
      %v1364 = vmax.f32 %v1300, 0.0
      %v1365 = vmax.f32 %v1301, 0.0
      %v1366 = vmax.f32 %v1302, 0.0
      %v1367 = vmax.f32 %v1303, 0.0
      %v1368 = vpack.c.bf16 %v1305, %v1304
      %v1369 = vpack.c.bf16 %v1307, %v1306
      %v1370 = vpack.c.bf16 %v1309, %v1308
      %v1371 = vpack.c.bf16 %v1311, %v1310
      %v1372 = vpack.c.bf16 %v1313, %v1312
      %v1373 = vpack.c.bf16 %v1315, %v1314
      %v1374 = vpack.c.bf16 %v1317, %v1316
      %v1375 = vpack.c.bf16 %v1319, %v1318
      %v1376 = vpack.c.bf16 %v1321, %v1320
      %v1377 = vpack.c.bf16 %v1323, %v1322
      %v1378 = vpack.c.bf16 %v1325, %v1324
      %v1379 = vpack.c.bf16 %v1327, %v1326
      %v1380 = vpack.c.bf16 %v1329, %v1328
      %v1381 = vpack.c.bf16 %v1331, %v1330
      %v1382 = vpack.c.bf16 %v1333, %v1332
      %v1383 = vpack.c.bf16 %v1335, %v1334
      %v1384 = vpack.c.bf16 %v1337, %v1336
      %v1385 = vpack.c.bf16 %v1339, %v1338
      %v1386 = vpack.c.bf16 %v1341, %v1340
      %v1387 = vpack.c.bf16 %v1343, %v1342
      %v1388 = vpack.c.bf16 %v1345, %v1344
      %v1389 = vpack.c.bf16 %v1347, %v1346
      %v1390 = vpack.c.bf16 %v1349, %v1348
      %v1391 = vpack.c.bf16 %v1351, %v1350
      %v1392 = vpack.c.bf16 %v1353, %v1352
      %v1393 = vpack.c.bf16 %v1355, %v1354
      %v1394 = vpack.c.bf16 %v1357, %v1356
      %v1395 = vpack.c.bf16 %v1359, %v1358
      %v1396 = vpack.c.bf16 %v1361, %v1360
      %v1397 = vpack.c.bf16 %v1363, %v1362
      %v1398 = vpack.c.bf16 %v1365, %v1364
      %v1399 = vpack.c.bf16 %v1367, %v1366
      %v1432 = vunpack.c.l.b16 %v1368
      %v1433 = vunpack.c.h.b16 %v1368
      %v1434 = vunpack.c.l.b16 %v1369
      %v1435 = vunpack.c.h.b16 %v1369
      %v1436 = vunpack.c.l.b16 %v1370
      %v1437 = vunpack.c.h.b16 %v1370
      %v1438 = vunpack.c.l.b16 %v1371
      %v1439 = vunpack.c.h.b16 %v1371
      %v1440 = vunpack.c.l.b16 %v1372
      %v1441 = vunpack.c.h.b16 %v1372
      %v1442 = vunpack.c.l.b16 %v1373
      %v1443 = vunpack.c.h.b16 %v1373
      %v1444 = vunpack.c.l.b16 %v1374
      %v1445 = vunpack.c.h.b16 %v1374
      %v1446 = vunpack.c.l.b16 %v1375
      %v1447 = vunpack.c.h.b16 %v1375
      %v1448 = vunpack.c.l.b16 %v1376
      %v1449 = vunpack.c.h.b16 %v1376
      %v1450 = vunpack.c.l.b16 %v1377
      %v1451 = vunpack.c.h.b16 %v1377
      %v1452 = vunpack.c.l.b16 %v1378
      %v1453 = vunpack.c.h.b16 %v1378
      %v1454 = vunpack.c.l.b16 %v1379
      %v1455 = vunpack.c.h.b16 %v1379
      %v1456 = vunpack.c.l.b16 %v1380
      %v1457 = vunpack.c.h.b16 %v1380
      %v1458 = vunpack.c.l.b16 %v1381
      %v1459 = vunpack.c.h.b16 %v1381
      %v1460 = vunpack.c.l.b16 %v1382
      %v1461 = vunpack.c.h.b16 %v1382
      %v1462 = vunpack.c.l.b16 %v1383
      %v1463 = vunpack.c.h.b16 %v1383
      %v1464 = vunpack.c.l.b16 %v1384
      %v1465 = vunpack.c.h.b16 %v1384
      %v1466 = vunpack.c.l.b16 %v1385
      %v1467 = vunpack.c.h.b16 %v1385
      %v1468 = vunpack.c.l.b16 %v1386
      %v1469 = vunpack.c.h.b16 %v1386
      %v1470 = vunpack.c.l.b16 %v1387
      %v1471 = vunpack.c.h.b16 %v1387
      %v1472 = vunpack.c.l.b16 %v1388
      %v1473 = vunpack.c.h.b16 %v1388
      %v1474 = vunpack.c.l.b16 %v1389
      %v1475 = vunpack.c.h.b16 %v1389
      %v1476 = vunpack.c.l.b16 %v1390
      %v1477 = vunpack.c.h.b16 %v1390
      %v1478 = vunpack.c.l.b16 %v1391
      %v1479 = vunpack.c.h.b16 %v1391
      %v1480 = vunpack.c.l.b16 %v1392
      %v1481 = vunpack.c.h.b16 %v1392
      %v1482 = vunpack.c.l.b16 %v1393
      %v1483 = vunpack.c.h.b16 %v1393
      %v1484 = vunpack.c.l.b16 %v1394
      %v1485 = vunpack.c.h.b16 %v1394
      %v1486 = vunpack.c.l.b16 %v1395
      %v1487 = vunpack.c.h.b16 %v1395
      %v1488 = vunpack.c.l.b16 %v1396
      %v1489 = vunpack.c.h.b16 %v1396
      %v1490 = vunpack.c.l.b16 %v1397
      %v1491 = vunpack.c.h.b16 %v1397
      %v1492 = vunpack.c.l.b16 %v1398
      %v1493 = vunpack.c.h.b16 %v1398
      %v1494 = vunpack.c.l.b16 %v1399
      %v1495 = vunpack.c.h.b16 %v1399
      %v1496 = vpack.c.b16 %v1432, %v1432
      %v1497 = vpack.c.b16 %v1433, %v1433
      %v1498 = vpack.c.b16 %v1434, %v1434
      %v1499 = vpack.c.b16 %v1435, %v1435
      %v1500 = vpack.c.b16 %v1436, %v1436
      %v1501 = vpack.c.b16 %v1437, %v1437
      %v1502 = vpack.c.b16 %v1438, %v1438
      %v1503 = vpack.c.b16 %v1439, %v1439
      %v1504 = vpack.c.b16 %v1440, %v1440
      %v1505 = vpack.c.b16 %v1441, %v1441
      %v1506 = vpack.c.b16 %v1442, %v1442
      %v1507 = vpack.c.b16 %v1443, %v1443
      %v1508 = vpack.c.b16 %v1444, %v1444
      %v1509 = vpack.c.b16 %v1445, %v1445
      %v1510 = vpack.c.b16 %v1446, %v1446
      %v1511 = vpack.c.b16 %v1447, %v1447
      %v1512 = vpack.c.b16 %v1448, %v1448
      %v1513 = vpack.c.b16 %v1449, %v1449
      %v1514 = vpack.c.b16 %v1450, %v1450
      %v1515 = vpack.c.b16 %v1451, %v1451
      %v1516 = vpack.c.b16 %v1452, %v1452
      %v1517 = vpack.c.b16 %v1453, %v1453
      %v1518 = vpack.c.b16 %v1454, %v1454
      %v1519 = vpack.c.b16 %v1455, %v1455
      %v1520 = vpack.c.b16 %v1456, %v1456
      %v1521 = vpack.c.b16 %v1457, %v1457
      %v1522 = vpack.c.b16 %v1458, %v1458
      %v1523 = vpack.c.b16 %v1459, %v1459
      %v1524 = vpack.c.b16 %v1460, %v1460
      %v1525 = vpack.c.b16 %v1461, %v1461
      %v1526 = vpack.c.b16 %v1462, %v1462
      %v1527 = vpack.c.b16 %v1463, %v1463
      %v1528 = vpack.c.b16 %v1464, %v1464
      %v1529 = vpack.c.b16 %v1465, %v1465
      %v1530 = vpack.c.b16 %v1466, %v1466
      %v1531 = vpack.c.b16 %v1467, %v1467
      %v1532 = vpack.c.b16 %v1468, %v1468
      %v1533 = vpack.c.b16 %v1469, %v1469
      %v1534 = vpack.c.b16 %v1470, %v1470
      %v1535 = vpack.c.b16 %v1471, %v1471
      %v1536 = vpack.c.b16 %v1472, %v1472
      %v1537 = vpack.c.b16 %v1473, %v1473
      %v1538 = vpack.c.b16 %v1474, %v1474
      %v1539 = vpack.c.b16 %v1475, %v1475
      %v1540 = vpack.c.b16 %v1476, %v1476
      %v1541 = vpack.c.b16 %v1477, %v1477
      %v1542 = vpack.c.b16 %v1478, %v1478
      %v1543 = vpack.c.b16 %v1479, %v1479
      %v1544 = vpack.c.b16 %v1480, %v1480
      %v1545 = vpack.c.b16 %v1481, %v1481
      %v1546 = vpack.c.b16 %v1482, %v1482
      %v1547 = vpack.c.b16 %v1483, %v1483
      %v1548 = vpack.c.b16 %v1484, %v1484
      %v1549 = vpack.c.b16 %v1485, %v1485
      %v1550 = vpack.c.b16 %v1486, %v1486
      %v1551 = vpack.c.b16 %v1487, %v1487
      %v1552 = vpack.c.b16 %v1488, %v1488
      %v1553 = vpack.c.b16 %v1489, %v1489
      %v1554 = vpack.c.b16 %v1490, %v1490
      %v1555 = vpack.c.b16 %v1491, %v1491
      %v1556 = vpack.c.b16 %v1492, %v1492
      %v1557 = vpack.c.b16 %v1493, %v1493
      %v1558 = vpack.c.b16 %v1494, %v1494
      %v1559 = vpack.c.b16 %v1495, %v1495
      %vm1624 = vcmask 519168
      %1625 = vst.msk [vmem:[%s4] sm:$0xf] %vm1624, %v1496
      %1626 = vst.msk [vmem:[%s4 + $0x4] sm:$0xf] %vm1624, %v1497
      %1627 = vst.msk [vmem:[%s4 + $0x8] sm:$0xf] %vm1624, %v1498
      %1628 = vst.msk [vmem:[%s4 + $0xc] sm:$0xf] %vm1624, %v1499
      %1629 = vst.msk [vmem:[%s4 + $0x10] sm:$0xf] %vm1624, %v1500
      %1630 = vst.msk [vmem:[%s4 + $0x14] sm:$0xf] %vm1624, %v1501
      %1631 = vst.msk [vmem:[%s4 + $0x18] sm:$0xf] %vm1624, %v1502
      %1632 = vst.msk [vmem:[%s4 + $0x1c] sm:$0xf] %vm1624, %v1503
      %1633 = vst.msk [vmem:[%s4 + $0x20] sm:$0xf] %vm1624, %v1504
      %1634 = vst.msk [vmem:[%s4 + $0x24] sm:$0xf] %vm1624, %v1505
      %1635 = vst.msk [vmem:[%s4 + $0x28] sm:$0xf] %vm1624, %v1506
      %1636 = vst.msk [vmem:[%s4 + $0x2c] sm:$0xf] %vm1624, %v1507
      %1637 = vst.msk [vmem:[%s4 + $0x30] sm:$0xf] %vm1624, %v1508
      %1638 = vst.msk [vmem:[%s4 + $0x34] sm:$0xf] %vm1624, %v1509
      %1639 = vst.msk [vmem:[%s4 + $0x38] sm:$0xf] %vm1624, %v1510
      %1640 = vst.msk [vmem:[%s4 + $0x3c] sm:$0xf] %vm1624, %v1511
      %1641 = vst.msk [vmem:[%s4 + $0x40] sm:$0xf] %vm1624, %v1512
      %1642 = vst.msk [vmem:[%s4 + $0x44] sm:$0xf] %vm1624, %v1513
      %1643 = vst.msk [vmem:[%s4 + $0x48] sm:$0xf] %vm1624, %v1514
      %1644 = vst.msk [vmem:[%s4 + $0x4c] sm:$0xf] %vm1624, %v1515
      %1645 = vst.msk [vmem:[%s4 + $0x50] sm:$0xf] %vm1624, %v1516
      %1646 = vst.msk [vmem:[%s4 + $0x54] sm:$0xf] %vm1624, %v1517
      %1647 = vst.msk [vmem:[%s4 + $0x58] sm:$0xf] %vm1624, %v1518
      %1648 = vst.msk [vmem:[%s4 + $0x5c] sm:$0xf] %vm1624, %v1519
      %1649 = vst.msk [vmem:[%s4 + $0x60] sm:$0xf] %vm1624, %v1520
      %1650 = vst.msk [vmem:[%s4 + $0x64] sm:$0xf] %vm1624, %v1521
      %1651 = vst.msk [vmem:[%s4 + $0x68] sm:$0xf] %vm1624, %v1522
      %1652 = vst.msk [vmem:[%s4 + $0x6c] sm:$0xf] %vm1624, %v1523
      %1653 = vst.msk [vmem:[%s4 + $0x70] sm:$0xf] %vm1624, %v1524
      %1654 = vst.msk [vmem:[%s4 + $0x74] sm:$0xf] %vm1624, %v1525
      %1655 = vst.msk [vmem:[%s4 + $0x78] sm:$0xf] %vm1624, %v1526
      %1656 = vst.msk [vmem:[%s4 + $0x7c] sm:$0xf] %vm1624, %v1527
      %1657 = vst.msk [vmem:[%s4 + $0x80] sm:$0xf] %vm1624, %v1528
      %1658 = vst.msk [vmem:[%s4 + $0x84] sm:$0xf] %vm1624, %v1529
      %1659 = vst.msk [vmem:[%s4 + $0x88] sm:$0xf] %vm1624, %v1530
      %1660 = vst.msk [vmem:[%s4 + $0x8c] sm:$0xf] %vm1624, %v1531
      %1661 = vst.msk [vmem:[%s4 + $0x90] sm:$0xf] %vm1624, %v1532
      %1662 = vst.msk [vmem:[%s4 + $0x94] sm:$0xf] %vm1624, %v1533
      %1663 = vst.msk [vmem:[%s4 + $0x98] sm:$0xf] %vm1624, %v1534
      %1664 = vst.msk [vmem:[%s4 + $0x9c] sm:$0xf] %vm1624, %v1535
      %1665 = vst.msk [vmem:[%s4 + $0xa0] sm:$0xf] %vm1624, %v1536
      %1666 = vst.msk [vmem:[%s4 + $0xa4] sm:$0xf] %vm1624, %v1537
      %1667 = vst.msk [vmem:[%s4 + $0xa8] sm:$0xf] %vm1624, %v1538
      %1668 = vst.msk [vmem:[%s4 + $0xac] sm:$0xf] %vm1624, %v1539
      %1669 = vst.msk [vmem:[%s4 + $0xb0] sm:$0xf] %vm1624, %v1540
      %1670 = vst.msk [vmem:[%s4 + $0xb4] sm:$0xf] %vm1624, %v1541
      %1671 = vst.msk [vmem:[%s4 + $0xb8] sm:$0xf] %vm1624, %v1542
      %1672 = vst.msk [vmem:[%s4 + $0xbc] sm:$0xf] %vm1624, %v1543
      %1673 = vst.msk [vmem:[%s4 + $0xc0] sm:$0xf] %vm1624, %v1544
      %1674 = vst.msk [vmem:[%s4 + $0xc4] sm:$0xf] %vm1624, %v1545
      %1675 = vst.msk [vmem:[%s4 + $0xc8] sm:$0xf] %vm1624, %v1546
      %1676 = vst.msk [vmem:[%s4 + $0xcc] sm:$0xf] %vm1624, %v1547
      %1677 = vst.msk [vmem:[%s4 + $0xd0] sm:$0xf] %vm1624, %v1548
      %1678 = vst.msk [vmem:[%s4 + $0xd4] sm:$0xf] %vm1624, %v1549
      %1679 = vst.msk [vmem:[%s4 + $0xd8] sm:$0xf] %vm1624, %v1550
      %1680 = vst.msk [vmem:[%s4 + $0xdc] sm:$0xf] %vm1624, %v1551
      %1681 = vst.msk [vmem:[%s4 + $0xe0] sm:$0xf] %vm1624, %v1552
      %1682 = vst.msk [vmem:[%s4 + $0xe4] sm:$0xf] %vm1624, %v1553
      %1683 = vst.msk [vmem:[%s4 + $0xe8] sm:$0xf] %vm1624, %v1554
      %1684 = vst.msk [vmem:[%s4 + $0xec] sm:$0xf] %vm1624, %v1555
      %1685 = vst.msk [vmem:[%s4 + $0xf0] sm:$0xf] %vm1624, %v1556
      %1686 = vst.msk [vmem:[%s4 + $0xf4] sm:$0xf] %vm1624, %v1557
      %1687 = vst.msk [vmem:[%s4 + $0xf8] sm:$0xf] %vm1624, %v1558
      %1688 = vst.msk [vmem:[%s4 + $0xfc] sm:$0xf] %vm1624, %v1559
    $region29: #{tpu_custom_call.1} parent=1 // pred_fallthru
      _
    // Predicated region
    $region30: #{tpu_custom_call.1} parent=1 // pred_check
      _
    $region31: #{tpu_custom_call.1} parent=1 // pred_check_branch
      %1690 = sbr.rel (0) target = $region33
    $region32: #{tpu_custom_call.1} parent=1 // pred_region
      _
    $region33: #{tpu_custom_call.1} parent=1 // pred_fallthru
      _
    // Predicated region
    $region34: #{tpu_custom_call.1} parent=1 // pred_check
      _
    $region35: #{tpu_custom_call.1} parent=1 // pred_check_branch
      %1692 = sbr.rel (0) target = $region37
    $region36: #{tpu_custom_call.1} parent=1 // pred_region
      _
    $region37: #{tpu_custom_call.1} parent=1 // pred_fallthru
      _
    %1693 = vsyncpa [#allocation4], 1

</llo_original>
